<compile_context>
chip_gen: v7x
topology: tpu7x:2x2x1
jax: 0.10.0
libtpu: 0.0.40
codegen_flags: <defaults>
</compile_context>

<pallas_src>
import functools

import jax
import jax.numpy as jnp
import numpy as np
from jax import lax
from jax.experimental import pallas as pl
from jax.experimental.pallas import tpu as pltpu

LANE = 128
_FULL_UNROLL_MAX_ROWS = 32


def _maybe_aligned(idx, align):
    """pl.multiple_of hint for traced indices; static ints pass through."""
    if isinstance(idx, (int, np.integer)):
        return idx
    return pl.multiple_of(idx, align)


def _resblock_kernel(x_ref, wcat_ref, w2_ref, b1_ref, bout_ref,
                     out_ref, f_ref, sc_ref, *, cin_p, cp, cout, ho):
    """Fused residual block for one N-tile.

    x_ref   : ((2*Ho+1)*Cin_p, NT)  H-padded x; (row, channel) folded on sublanes
    wcat_ref: (2*Cout_p, 3*Cin_p)   conv1 weights stacked on shortcut weights
    w2_ref  : (Cout_p, 3*Cout_p)    conv2 weights, taps folded into K
    b1_ref  : (Cout_p, 1)           conv1 bias (pre-ReLU), f32
    bout_ref: (Cout_p, 1)           b2 + bs (applied after the residual add), f32
    out_ref : (Ho, Cout, NT)        written exactly once per row
    f_ref   : ((Ho+2)*Cout_p, NT)   relu(conv1) slab incl. conv2's two pad rows
    sc_ref  : (2, Cout_p, NT)       2-slot rolling shortcut scratch (f32)
    """
    nt = f_ref.shape[-1]

    # Hoisted tiny loads (a handful of vregs).  The (Cp, NT) bias broadcasts
    # happen at the use site so no wide constant stays live across the loop.
    wcat = wcat_ref[...]
    w2f = w2_ref[...]
    b1 = b1_ref[...]
    bout = bout_ref[...]

    # conv2's two zero pad rows; the only slab rows phase_a never writes.
    f_ref[0:cp] = jnp.zeros((cp, nt), f_ref.dtype)
    f_ref[(ho + 1) * cp:(ho + 2) * cp] = jnp.zeros((cp, nt), f_ref.dtype)

    def phase_a(j):
        # conv1 + shortcut row j: one stacked dot with the 3 taps folded into K.
        xs = x_ref[pl.ds(_maybe_aligned(2 * j * cin_p, 2 * cin_p), 3 * cin_p)]
        cat = jnp.dot(wcat, xs, preferred_element_type=jnp.float32)
        f_row = jnp.maximum(cat[:cp] + b1, 0.0)          # split is tile-aligned
        f_ref[pl.ds(_maybe_aligned((j + 1) * cp, cp), cp)] = (
            f_row.astype(f_ref.dtype))
        sc_ref[j & 1] = cat[cp:]                          # bias-free shortcut row

    def phase_b(h):
        # conv2 row h + residual + relu: one dot, lane-dense single store.
        fs = f_ref[pl.ds(_maybe_aligned(h * cp, cp), 3 * cp)]
        acc = jnp.dot(w2f, fs, preferred_element_type=jnp.float32)
        val = jnp.maximum(acc + sc_ref[h & 1] + bout, 0.0)
        out_ref[h] = val[:cout].astype(out_ref.dtype)

    # Peeled prologue / steady state / epilogue: no pl.when in the hot loop.
    # NOTE: phase_a(j) must stay textually before phase_b(j-1) -- the finalize
    # reads the relu row that phase_a just wrote into the slab.
    phase_a(0)
    if ho <= _FULL_UNROLL_MAX_ROWS:
        for j in range(1, ho):
            phase_a(j)
            phase_b(j - 1)
    else:
        def body(j, carry):
            phase_a(j)
            phase_b(j - 1)
            return carry
        lax.fori_loop(1, ho, body, 0, unroll=4)
    phase_b(ho - 1)


def _pick_tile(n, per_lane_bytes, budget, max_lanes=4096):
    """Largest 128-multiple N tile under the VMEM budget; guarantees >= 2 grid
    steps when N allows it so dual-TensorCore chips (v7x) get work on both."""
    if n <= LANE:
        return n                              # full-dim block (< 128 is legal)
    n_tiles = -(-n // LANE)
    cap = min(max_lanes // LANE, n_tiles)
    if n >= 2 * LANE:
        cap = min(cap, -(-n_tiles // 2))      # at least 2 grid steps
    best = 1
    for t in range(1, cap + 1):
        if t * LANE * per_lane_bytes <= budget:
            best = t
    return best * LANE


def _vmem_plan(per_lane_bytes, n):
    """Generation-aware (N tile, vmem_limit_bytes)."""
    try:
        cap = int(pltpu.get_tpu_info().vmem_capacity_bytes)
    except Exception:
        cap = 64 * 1024 * 1024                # safe floor (v7x per-core VMEM)
    if cap >= 96 * 1024 * 1024:               # v5e / v6e: 128 MiB physical
        budget, limit = 40 * 1024 * 1024, 100 * 1024 * 1024
    else:                                     # v7x-class: 64 MiB per core
        budget, limit = 22 * 1024 * 1024, 48 * 1024 * 1024
    nt = _pick_tile(n, per_lane_bytes, budget)
    limit = max(limit, min(nt * per_lane_bytes + (8 << 20), cap - (8 << 20)))
    return nt, int(limit)


def res_block_conv_shortcut(x, params, *, compute_dtype=jnp.float32):
    """x: (B, Cin, H, W) f32 NCHW.  Returns (B, Cout, ceil(H/2), W) f32.

    compute_dtype=jnp.bfloat16 is recommended on v6e/v7x (halves x/weight/slab
    traffic, doubles MXU rate); keep f32 on v5e.  Accumulation is always f32.
    """
    w1, b1, w2, b2, ws, bs = params
    B, Cin, H, W = x.shape
    Cout = w1.shape[0]
    Ho = (H + 1) // 2
    N = B * W

    in_bytes = jnp.dtype(compute_dtype).itemsize
    sub = 8 * (4 // in_bytes)                        # sublane tile: 8 f32 / 16 bf16
    cin_p = -(-Cin // (sub // 2)) * (sub // 2)       # 2*Cin_p is tile-aligned
    cp = -(-Cout // sub) * sub                       # padded Cout (aligned split)
    h_pad = 2 * Ho + 1                               # 1 top pad row (+1 iff H odd)

    # NCHW -> (H, C, B*W) slab with H/channel zero pad, one fused wrapper pass.
    # TODO(synk): if the surrounding model keeps activations in this (H, C, B*W)
    # layout end-to-end, this transpose and the output one disappear entirely.
    xt = jnp.transpose(x, (2, 1, 0, 3)).reshape(H, Cin, N)
    x_slab = jnp.pad(xt, ((1, h_pad - H - 1), (0, cin_p - Cin), (0, 0)))
    x_slab = x_slab.reshape(h_pad * cin_p, N).astype(compute_dtype)

    def fold_taps(w, kin, kin_p):
        # OIHW (Cout, kin, 3, 1) -> (Cout_p, 3*kin_p); K order = tap-major,
        # channel-minor, matching the flattened (row, channel) x / relu slabs.
        wk = jnp.transpose(w[:, :, :, 0], (0, 2, 1))            # (Cout, 3, kin)
        wk = jnp.pad(wk, ((0, cp - Cout), (0, 0), (0, kin_p - kin)))
        return wk.reshape(cp, 3 * kin_p)

    wcat = jnp.concatenate([fold_taps(w1, Cin, cin_p),
                            fold_taps(ws, Cin, cin_p)],
                           axis=0).astype(compute_dtype)          # (2Cp, 3Cin_p)
    w2f = fold_taps(w2, Cout, cp).astype(compute_dtype)           # (Cp, 3Cp)

    b1k = jnp.pad(b1, (0, cp - Cout)).reshape(cp, 1).astype(jnp.float32)
    boutk = jnp.pad(b2 + bs, (0, cp - Cout)).reshape(cp, 1).astype(jnp.float32)

    per_lane = (2 * h_pad * cin_p * in_bytes         # x block (double buffered)
                + 2 * Ho * Cout * 4                  # out block (double buffered)
                + (Ho + 2) * cp * in_bytes           # relu(conv1) slab scratch
                + 2 * cp * 4)                        # shortcut scratch
    NT, vmem_limit = _vmem_plan(per_lane, N)
    grid = (pl.cdiv(N, NT),)

    kernel = functools.partial(_resblock_kernel, cin_p=cin_p, cp=cp,
                               cout=Cout, ho=Ho)

    out = pl.pallas_call(
        kernel,
        out_shape=jax.ShapeDtypeStruct((Ho, Cout, N), jnp.float32),
        grid_spec=pltpu.PrefetchScalarGridSpec(
            num_scalar_prefetch=0,
            grid=grid,
            in_specs=[
                pl.BlockSpec((h_pad * cin_p, NT), lambda n: (0, n)),
                pl.BlockSpec((2 * cp, 3 * cin_p), lambda n: (0, 0)),
                pl.BlockSpec((cp, 3 * cp), lambda n: (0, 0)),
                pl.BlockSpec((cp, 1), lambda n: (0, 0)),
                pl.BlockSpec((cp, 1), lambda n: (0, 0)),
            ],
            out_specs=pl.BlockSpec((Ho, Cout, NT), lambda n: (0, 0, n)),
            scratch_shapes=[
                pltpu.VMEM(((Ho + 2) * cp, NT), compute_dtype),
                pltpu.VMEM((2, cp, NT), jnp.float32),
            ],
        ),
        compiler_params=pltpu.CompilerParams(
            dimension_semantics=("parallel",),
            vmem_limit_bytes=vmem_limit,
        ),
    )(x_slab, wcat, w2f, b1k, boutk)

    # (Ho, Cout, B*W) -> NCHW (B, Cout, Ho, W)
    return jnp.transpose(out.reshape(Ho, Cout, B, W), (2, 1, 0, 3))


def init_params(key, cin, cout):
    k1, k2, k3, k4, k5, k6 = jax.random.split(key, 6)
    w1 = jax.random.normal(k1, (cout, cin, 3, 1), jnp.float32) * 0.1
    b1 = jax.random.normal(k2, (cout,), jnp.float32) * 0.1
    w2 = jax.random.normal(k3, (cout, cout, 3, 1), jnp.float32) * 0.1
    b2 = jax.random.normal(k4, (cout,), jnp.float32) * 0.1
    ws = jax.random.normal(k5, (cout, cin, 3, 1), jnp.float32) * 0.1
    bs = jax.random.normal(k6, (cout,), jnp.float32) * 0.1
    return (w1, b1, w2, b2, ws, bs)


def ref_forward(x, params):
    """Pure-JAX reference matching the PyTorch module semantics (NCHW/OIHW)."""
    w1, b1, w2, b2, ws, bs = params
    dn1 = jax.lax.conv_dimension_numbers(x.shape, w1.shape,
                                         ('NCHW', 'OIHW', 'NCHW'))
    c1 = jax.lax.conv_general_dilated(x, w1, (2, 1), ((1, 1), (0, 0)),
                                      dimension_numbers=dn1)
    c1 = c1 + b1[None, :, None, None]
    f = jnp.maximum(c1, 0.0)
    dn2 = jax.lax.conv_dimension_numbers(f.shape, w2.shape,
                                         ('NCHW', 'OIHW', 'NCHW'))
    c2 = jax.lax.conv_general_dilated(f, w2, (1, 1), ((1, 1), (0, 0)),
                                      dimension_numbers=dn2)
    c2 = c2 + b2[None, :, None, None]
    sc = jax.lax.conv_general_dilated(x, ws, (2, 1), ((1, 1), (0, 0)),
                                      dimension_numbers=dn1)
    sc = sc + bs[None, :, None, None]
    return jnp.maximum(c2 + sc, 0.0)


if __name__ == "__main__":
    key = jax.random.PRNGKey(0)
    kx, kp = jax.random.split(key)

    B, Cin, H, W = 2, 4, 16, 16
    Cout = 8
    x = jax.random.normal(kx, (B, Cin, H, W), jnp.float32)
    params = init_params(kp, Cin, Cout)

    expected = jax.block_until_ready(ref_forward(x, params))

    # Default f32 path: must match the f32 reference tightly.
    out = jax.block_until_ready(jax.jit(res_block_conv_shortcut)(x, params))
    assert out.shape == expected.shape, (out.shape, expected.shape)
    np.testing.assert_allclose(np.asarray(out), np.asarray(expected),
                               rtol=1e-4, atol=1e-4)

    # bf16 compute path (v6e/v7x HBM/MXU optimization): looser tolerance.
    fwd_bf16 = jax.jit(functools.partial(res_block_conv_shortcut,
                                         compute_dtype=jnp.bfloat16))
    out_bf16 = jax.block_until_ready(fwd_bf16(x, params))
    np.testing.assert_allclose(np.asarray(out_bf16), np.asarray(expected),
                               rtol=5e-2, atol=5e-2)

    print("KERNEL_OK")
</pallas_src>

<mosaic_0001>
module attributes {stable_mosaic.version = 11 : i64} {
  func.func @_resblock_kernel(%arg0: i32, %arg1: memref<68x32xf32, #tpu.memory_space<vmem>>, %arg2: memref<16x12xf32, #tpu.memory_space<vmem>>, %arg3: memref<8x24xf32, #tpu.memory_space<vmem>>, %arg4: memref<8x1xf32, #tpu.memory_space<vmem>>, %arg5: memref<8x1xf32, #tpu.memory_space<vmem>>, %arg6: memref<8x8x32xf32, #tpu.memory_space<vmem>>, %arg7: memref<80x32xf32, #tpu.memory_space<vmem>>, %arg8: memref<2x8x32xf32, #tpu.memory_space<vmem>>) attributes {dimension_semantics = [#tpu.dimension_semantics<parallel>], iteration_bounds = array<i64: 1>, scalar_prefetch = 0 : i64, scratch_operands = 2 : i64, tpu.core_type = #tpu.core_type<tc>, window_params = [{transform_indices = @transform_0, window_bounds = array<i64: 68, 32>}, {pipeline_mode = #tpu.pipeline_mode<synchronous>, transform_indices = @transform_1, window_bounds = array<i64: 16, 12>}, {pipeline_mode = #tpu.pipeline_mode<synchronous>, transform_indices = @transform_2, window_bounds = array<i64: 8, 24>}, {pipeline_mode = #tpu.pipeline_mode<synchronous>, transform_indices = @transform_3, window_bounds = array<i64: 8, 1>}, {pipeline_mode = #tpu.pipeline_mode<synchronous>, transform_indices = @transform_4, window_bounds = array<i64: 8, 1>}, {transform_indices = @transform_5, window_bounds = array<i64: 8, 8, 32>}]} {
    %c0 = arith.constant 0 : index
    %c0_0 = arith.constant 0 : index
    %0 = vector.load %arg2[%c0, %c0_0] : memref<16x12xf32, #tpu.memory_space<vmem>>, vector<16x12xf32>
    %c0_1 = arith.constant 0 : index
    %c0_2 = arith.constant 0 : index
    %1 = vector.load %arg3[%c0_1, %c0_2] : memref<8x24xf32, #tpu.memory_space<vmem>>, vector<8x24xf32>
    %c0_3 = arith.constant 0 : index
    %c0_4 = arith.constant 0 : index
    %2 = vector.load %arg4[%c0_3, %c0_4] : memref<8x1xf32, #tpu.memory_space<vmem>>, vector<8x1xf32>
    %c0_5 = arith.constant 0 : index
    %c0_6 = arith.constant 0 : index
    %3 = vector.load %arg5[%c0_5, %c0_6] : memref<8x1xf32, #tpu.memory_space<vmem>>, vector<8x1xf32>
    %cst = arith.constant 0.000000e+00 : f32
    %4 = vector.broadcast %cst : f32 to vector<8x32xf32>
    %c0_7 = arith.constant 0 : index
    %c0_8 = arith.constant 0 : index
    %5 = vector.load %arg7[%c0_7, %c0_8] : memref<80x32xf32, #tpu.memory_space<vmem>>, vector<8x32xf32>
    tpu.vector_store %arg7[%c0_7, %c0_8], %4 {strides = array<i32>} : memref<80x32xf32, #tpu.memory_space<vmem>>, vector<8x32xf32>,
    %cst_9 = arith.constant 0.000000e+00 : f32
    %6 = vector.broadcast %cst_9 : f32 to vector<8x32xf32>
    %c72 = arith.constant 72 : index
    %c0_10 = arith.constant 0 : index
    %7 = vector.load %arg7[%c72, %c0_10] : memref<80x32xf32, #tpu.memory_space<vmem>>, vector<8x32xf32>
    tpu.vector_store %arg7[%c72, %c0_10], %6 {strides = array<i32>} : memref<80x32xf32, #tpu.memory_space<vmem>>, vector<8x32xf32>,
    %c0_11 = arith.constant 0 : index
    %c0_12 = arith.constant 0 : index
    %8 = vector.load %arg1[%c0_11, %c0_12] : memref<68x32xf32, #tpu.memory_space<vmem>>, vector<12x32xf32>
    %cst_13 = arith.constant dense<0.000000e+00> : vector<16x32xf32>
    %9 = tpu.matmul %0, %8, %cst_13 {dimension_numbers = #tpu.dot_dimension_numbers<[1], [0], [0], [1], [0, 0, 1, 1], [], []>} : vector<16x12xf32>, vector<12x32xf32>, vector<16x32xf32> -> vector<16x32xf32>
    %10 = vector.extract_strided_slice %9 {offsets = [0, 0], sizes = [8, 32], strides = [1, 1]} : vector<16x32xf32> to vector<8x32xf32>
    %11 = vector.broadcast %2 : vector<8x1xf32> to vector<8x32xf32>
    %12 = arith.addf %10, %11 : vector<8x32xf32>
    %cst_14 = arith.constant 0.000000e+00 : f32
    %13 = vector.broadcast %cst_14 : f32 to vector<8x32xf32>
    %14 = arith.maximumf %12, %13 : vector<8x32xf32>
    %c8 = arith.constant 8 : index
    %c0_15 = arith.constant 0 : index
    %15 = vector.load %arg7[%c8, %c0_15] : memref<80x32xf32, #tpu.memory_space<vmem>>, vector<8x32xf32>
    tpu.vector_store %arg7[%c8, %c0_15], %14 {strides = array<i32>} : memref<80x32xf32, #tpu.memory_space<vmem>>, vector<8x32xf32>,
    %16 = vector.extract_strided_slice %9 {offsets = [8, 0], sizes = [8, 32], strides = [1, 1]} : vector<16x32xf32> to vector<8x32xf32>
    %c0_16 = arith.constant 0 : index
    %c0_17 = arith.constant 0 : index
    %c0_18 = arith.constant 0 : index
    %17 = vector.load %arg8[%c0_16, %c0_17, %c0_18] : memref<2x8x32xf32, #tpu.memory_space<vmem>>, vector<1x8x32xf32>
    %18 = vector.shape_cast %17 : vector<1x8x32xf32> to vector<8x32xf32>
    %19 = vector.shape_cast %16 : vector<8x32xf32> to vector<1x8x32xf32>
    tpu.vector_store %arg8[%c0_16, %c0_17, %c0_18], %19 {strides = array<i32>} : memref<2x8x32xf32, #tpu.memory_space<vmem>>, vector<1x8x32xf32>,
    %c8_19 = arith.constant 8 : index
    %c0_20 = arith.constant 0 : index
    %20 = vector.load %arg1[%c8_19, %c0_20] : memref<68x32xf32, #tpu.memory_space<vmem>>, vector<12x32xf32>
    %cst_21 = arith.constant dense<0.000000e+00> : vector<16x32xf32>
    %21 = tpu.matmul %0, %20, %cst_21 {dimension_numbers = #tpu.dot_dimension_numbers<[1], [0], [0], [1], [0, 0, 1, 1], [], []>} : vector<16x12xf32>, vector<12x32xf32>, vector<16x32xf32> -> vector<16x32xf32>
    %22 = vector.extract_strided_slice %21 {offsets = [0, 0], sizes = [8, 32], strides = [1, 1]} : vector<16x32xf32> to vector<8x32xf32>
    %23 = vector.broadcast %2 : vector<8x1xf32> to vector<8x32xf32>
    %24 = arith.addf %22, %23 : vector<8x32xf32>
    %cst_22 = arith.constant 0.000000e+00 : f32
    %25 = vector.broadcast %cst_22 : f32 to vector<8x32xf32>
    %26 = arith.maximumf %24, %25 : vector<8x32xf32>
    %c16 = arith.constant 16 : index
    %c0_23 = arith.constant 0 : index
    %27 = vector.load %arg7[%c16, %c0_23] : memref<80x32xf32, #tpu.memory_space<vmem>>, vector<8x32xf32>
    tpu.vector_store %arg7[%c16, %c0_23], %26 {strides = array<i32>} : memref<80x32xf32, #tpu.memory_space<vmem>>, vector<8x32xf32>,
    %28 = vector.extract_strided_slice %21 {offsets = [8, 0], sizes = [8, 32], strides = [1, 1]} : vector<16x32xf32> to vector<8x32xf32>
    %c1 = arith.constant 1 : index
    %c0_24 = arith.constant 0 : index
    %c0_25 = arith.constant 0 : index
    %29 = vector.load %arg8[%c1, %c0_24, %c0_25] : memref<2x8x32xf32, #tpu.memory_space<vmem>>, vector<1x8x32xf32>
    %30 = vector.shape_cast %29 : vector<1x8x32xf32> to vector<8x32xf32>
    %31 = vector.shape_cast %28 : vector<8x32xf32> to vector<1x8x32xf32>
    tpu.vector_store %arg8[%c1, %c0_24, %c0_25], %31 {strides = array<i32>} : memref<2x8x32xf32, #tpu.memory_space<vmem>>, vector<1x8x32xf32>,
    %c0_26 = arith.constant 0 : index
    %c0_27 = arith.constant 0 : index
    %32 = vector.load %arg7[%c0_26, %c0_27] : memref<80x32xf32, #tpu.memory_space<vmem>>, vector<24x32xf32>
    %cst_28 = arith.constant dense<0.000000e+00> : vector<8x32xf32>
    %33 = tpu.matmul %1, %32, %cst_28 {dimension_numbers = #tpu.dot_dimension_numbers<[1], [0], [0], [1], [0, 0, 1, 1], [], []>} : vector<8x24xf32>, vector<24x32xf32>, vector<8x32xf32> -> vector<8x32xf32>
    %c0_29 = arith.constant 0 : index
    %c0_30 = arith.constant 0 : index
    %c0_31 = arith.constant 0 : index
    %34 = vector.load %arg8[%c0_29, %c0_30, %c0_31] : memref<2x8x32xf32, #tpu.memory_space<vmem>>, vector<1x8x32xf32>
    %35 = vector.shape_cast %34 : vector<1x8x32xf32> to vector<8x32xf32>
    %36 = arith.addf %33, %35 : vector<8x32xf32>
    %37 = vector.broadcast %3 : vector<8x1xf32> to vector<8x32xf32>
    %38 = arith.addf %36, %37 : vector<8x32xf32>
    %cst_32 = arith.constant 0.000000e+00 : f32
    %39 = vector.broadcast %cst_32 : f32 to vector<8x32xf32>
    %40 = arith.maximumf %38, %39 : vector<8x32xf32>
    %c0_33 = arith.constant 0 : index
    %c0_34 = arith.constant 0 : index
    %c0_35 = arith.constant 0 : index
    %41 = vector.load %arg6[%c0_33, %c0_34, %c0_35] : memref<8x8x32xf32, #tpu.memory_space<vmem>>, vector<1x8x32xf32>
    %42 = vector.shape_cast %41 : vector<1x8x32xf32> to vector<8x32xf32>
    %43 = vector.shape_cast %40 : vector<8x32xf32> to vector<1x8x32xf32>
    tpu.vector_store %arg6[%c0_33, %c0_34, %c0_35], %43 {strides = array<i32>} : memref<8x8x32xf32, #tpu.memory_space<vmem>>, vector<1x8x32xf32>,
    %c16_36 = arith.constant 16 : index
    %c0_37 = arith.constant 0 : index
    %44 = vector.load %arg1[%c16_36, %c0_37] : memref<68x32xf32, #tpu.memory_space<vmem>>, vector<12x32xf32>
    %cst_38 = arith.constant dense<0.000000e+00> : vector<16x32xf32>
    %45 = tpu.matmul %0, %44, %cst_38 {dimension_numbers = #tpu.dot_dimension_numbers<[1], [0], [0], [1], [0, 0, 1, 1], [], []>} : vector<16x12xf32>, vector<12x32xf32>, vector<16x32xf32> -> vector<16x32xf32>
    %46 = vector.extract_strided_slice %45 {offsets = [0, 0], sizes = [8, 32], strides = [1, 1]} : vector<16x32xf32> to vector<8x32xf32>
    %47 = vector.broadcast %2 : vector<8x1xf32> to vector<8x32xf32>
    %48 = arith.addf %46, %47 : vector<8x32xf32>
    %cst_39 = arith.constant 0.000000e+00 : f32
    %49 = vector.broadcast %cst_39 : f32 to vector<8x32xf32>
    %50 = arith.maximumf %48, %49 : vector<8x32xf32>
    %c24 = arith.constant 24 : index
    %c0_40 = arith.constant 0 : index
    %51 = vector.load %arg7[%c24, %c0_40] : memref<80x32xf32, #tpu.memory_space<vmem>>, vector<8x32xf32>
    tpu.vector_store %arg7[%c24, %c0_40], %50 {strides = array<i32>} : memref<80x32xf32, #tpu.memory_space<vmem>>, vector<8x32xf32>,
    %52 = vector.extract_strided_slice %45 {offsets = [8, 0], sizes = [8, 32], strides = [1, 1]} : vector<16x32xf32> to vector<8x32xf32>
    %c0_41 = arith.constant 0 : index
    %c0_42 = arith.constant 0 : index
    %c0_43 = arith.constant 0 : index
    %53 = vector.load %arg8[%c0_41, %c0_42, %c0_43] : memref<2x8x32xf32, #tpu.memory_space<vmem>>, vector<1x8x32xf32>
    %54 = vector.shape_cast %53 : vector<1x8x32xf32> to vector<8x32xf32>
    %55 = vector.shape_cast %52 : vector<8x32xf32> to vector<1x8x32xf32>
    tpu.vector_store %arg8[%c0_41, %c0_42, %c0_43], %55 {strides = array<i32>} : memref<2x8x32xf32, #tpu.memory_space<vmem>>, vector<1x8x32xf32>,
    %c8_44 = arith.constant 8 : index
    %c0_45 = arith.constant 0 : index
    %56 = vector.load %arg7[%c8_44, %c0_45] : memref<80x32xf32, #tpu.memory_space<vmem>>, vector<24x32xf32>
    %cst_46 = arith.constant dense<0.000000e+00> : vector<8x32xf32>
    %57 = tpu.matmul %1, %56, %cst_46 {dimension_numbers = #tpu.dot_dimension_numbers<[1], [0], [0], [1], [0, 0, 1, 1], [], []>} : vector<8x24xf32>, vector<24x32xf32>, vector<8x32xf32> -> vector<8x32xf32>
    %c1_47 = arith.constant 1 : index
    %c0_48 = arith.constant 0 : index
    %c0_49 = arith.constant 0 : index
    %58 = vector.load %arg8[%c1_47, %c0_48, %c0_49] : memref<2x8x32xf32, #tpu.memory_space<vmem>>, vector<1x8x32xf32>
    %59 = vector.shape_cast %58 : vector<1x8x32xf32> to vector<8x32xf32>
    %60 = arith.addf %57, %59 : vector<8x32xf32>
    %61 = vector.broadcast %3 : vector<8x1xf32> to vector<8x32xf32>
    %62 = arith.addf %60, %61 : vector<8x32xf32>
    %cst_50 = arith.constant 0.000000e+00 : f32
    %63 = vector.broadcast %cst_50 : f32 to vector<8x32xf32>
    %64 = arith.maximumf %62, %63 : vector<8x32xf32>
    %c1_51 = arith.constant 1 : index
    %c0_52 = arith.constant 0 : index
    %c0_53 = arith.constant 0 : index
    %65 = vector.load %arg6[%c1_51, %c0_52, %c0_53] : memref<8x8x32xf32, #tpu.memory_space<vmem>>, vector<1x8x32xf32>
    %66 = vector.shape_cast %65 : vector<1x8x32xf32> to vector<8x32xf32>
    %67 = vector.shape_cast %64 : vector<8x32xf32> to vector<1x8x32xf32>
    tpu.vector_store %arg6[%c1_51, %c0_52, %c0_53], %67 {strides = array<i32>} : memref<8x8x32xf32, #tpu.memory_space<vmem>>, vector<1x8x32xf32>,
    %c24_54 = arith.constant 24 : index
    %c0_55 = arith.constant 0 : index
    %68 = vector.load %arg1[%c24_54, %c0_55] : memref<68x32xf32, #tpu.memory_space<vmem>>, vector<12x32xf32>
    %cst_56 = arith.constant dense<0.000000e+00> : vector<16x32xf32>
    %69 = tpu.matmul %0, %68, %cst_56 {dimension_numbers = #tpu.dot_dimension_numbers<[1], [0], [0], [1], [0, 0, 1, 1], [], []>} : vector<16x12xf32>, vector<12x32xf32>, vector<16x32xf32> -> vector<16x32xf32>
    %70 = vector.extract_strided_slice %69 {offsets = [0, 0], sizes = [8, 32], strides = [1, 1]} : vector<16x32xf32> to vector<8x32xf32>
    %71 = vector.broadcast %2 : vector<8x1xf32> to vector<8x32xf32>
    %72 = arith.addf %70, %71 : vector<8x32xf32>
    %cst_57 = arith.constant 0.000000e+00 : f32
    %73 = vector.broadcast %cst_57 : f32 to vector<8x32xf32>
    %74 = arith.maximumf %72, %73 : vector<8x32xf32>
    %c32 = arith.constant 32 : index
    %c0_58 = arith.constant 0 : index
    %75 = vector.load %arg7[%c32, %c0_58] : memref<80x32xf32, #tpu.memory_space<vmem>>, vector<8x32xf32>
    tpu.vector_store %arg7[%c32, %c0_58], %74 {strides = array<i32>} : memref<80x32xf32, #tpu.memory_space<vmem>>, vector<8x32xf32>,
    %76 = vector.extract_strided_slice %69 {offsets = [8, 0], sizes = [8, 32], strides = [1, 1]} : vector<16x32xf32> to vector<8x32xf32>
    %c1_59 = arith.constant 1 : index
    %c0_60 = arith.constant 0 : index
    %c0_61 = arith.constant 0 : index
    %77 = vector.load %arg8[%c1_59, %c0_60, %c0_61] : memref<2x8x32xf32, #tpu.memory_space<vmem>>, vector<1x8x32xf32>
    %78 = vector.shape_cast %77 : vector<1x8x32xf32> to vector<8x32xf32>
    %79 = vector.shape_cast %76 : vector<8x32xf32> to vector<1x8x32xf32>
    tpu.vector_store %arg8[%c1_59, %c0_60, %c0_61], %79 {strides = array<i32>} : memref<2x8x32xf32, #tpu.memory_space<vmem>>, vector<1x8x32xf32>,
    %c16_62 = arith.constant 16 : index
    %c0_63 = arith.constant 0 : index
    %80 = vector.load %arg7[%c16_62, %c0_63] : memref<80x32xf32, #tpu.memory_space<vmem>>, vector<24x32xf32>
    %cst_64 = arith.constant dense<0.000000e+00> : vector<8x32xf32>
    %81 = tpu.matmul %1, %80, %cst_64 {dimension_numbers = #tpu.dot_dimension_numbers<[1], [0], [0], [1], [0, 0, 1, 1], [], []>} : vector<8x24xf32>, vector<24x32xf32>, vector<8x32xf32> -> vector<8x32xf32>
    %c0_65 = arith.constant 0 : index
    %c0_66 = arith.constant 0 : index
    %c0_67 = arith.constant 0 : index
    %82 = vector.load %arg8[%c0_65, %c0_66, %c0_67] : memref<2x8x32xf32, #tpu.memory_space<vmem>>, vector<1x8x32xf32>
    %83 = vector.shape_cast %82 : vector<1x8x32xf32> to vector<8x32xf32>
    %84 = arith.addf %81, %83 : vector<8x32xf32>
    %85 = vector.broadcast %3 : vector<8x1xf32> to vector<8x32xf32>
    %86 = arith.addf %84, %85 : vector<8x32xf32>
    %cst_68 = arith.constant 0.000000e+00 : f32
    %87 = vector.broadcast %cst_68 : f32 to vector<8x32xf32>
    %88 = arith.maximumf %86, %87 : vector<8x32xf32>
    %c2 = arith.constant 2 : index
    %c0_69 = arith.constant 0 : index
    %c0_70 = arith.constant 0 : index
    %89 = vector.load %arg6[%c2, %c0_69, %c0_70] : memref<8x8x32xf32, #tpu.memory_space<vmem>>, vector<1x8x32xf32>
    %90 = vector.shape_cast %89 : vector<1x8x32xf32> to vector<8x32xf32>
    %91 = vector.shape_cast %88 : vector<8x32xf32> to vector<1x8x32xf32>
    tpu.vector_store %arg6[%c2, %c0_69, %c0_70], %91 {strides = array<i32>} : memref<8x8x32xf32, #tpu.memory_space<vmem>>, vector<1x8x32xf32>,
    %c32_71 = arith.constant 32 : index
    %c0_72 = arith.constant 0 : index
    %92 = vector.load %arg1[%c32_71, %c0_72] : memref<68x32xf32, #tpu.memory_space<vmem>>, vector<12x32xf32>
    %cst_73 = arith.constant dense<0.000000e+00> : vector<16x32xf32>
    %93 = tpu.matmul %0, %92, %cst_73 {dimension_numbers = #tpu.dot_dimension_numbers<[1], [0], [0], [1], [0, 0, 1, 1], [], []>} : vector<16x12xf32>, vector<12x32xf32>, vector<16x32xf32> -> vector<16x32xf32>
    %94 = vector.extract_strided_slice %93 {offsets = [0, 0], sizes = [8, 32], strides = [1, 1]} : vector<16x32xf32> to vector<8x32xf32>
    %95 = vector.broadcast %2 : vector<8x1xf32> to vector<8x32xf32>
    %96 = arith.addf %94, %95 : vector<8x32xf32>
    %cst_74 = arith.constant 0.000000e+00 : f32
    %97 = vector.broadcast %cst_74 : f32 to vector<8x32xf32>
    %98 = arith.maximumf %96, %97 : vector<8x32xf32>
    %c40 = arith.constant 40 : index
    %c0_75 = arith.constant 0 : index
    %99 = vector.load %arg7[%c40, %c0_75] : memref<80x32xf32, #tpu.memory_space<vmem>>, vector<8x32xf32>
    tpu.vector_store %arg7[%c40, %c0_75], %98 {strides = array<i32>} : memref<80x32xf32, #tpu.memory_space<vmem>>, vector<8x32xf32>,
    %100 = vector.extract_strided_slice %93 {offsets = [8, 0], sizes = [8, 32], strides = [1, 1]} : vector<16x32xf32> to vector<8x32xf32>
    %c0_76 = arith.constant 0 : index
    %c0_77 = arith.constant 0 : index
    %c0_78 = arith.constant 0 : index
    %101 = vector.load %arg8[%c0_76, %c0_77, %c0_78] : memref<2x8x32xf32, #tpu.memory_space<vmem>>, vector<1x8x32xf32>
    %102 = vector.shape_cast %101 : vector<1x8x32xf32> to vector<8x32xf32>
    %103 = vector.shape_cast %100 : vector<8x32xf32> to vector<1x8x32xf32>
    tpu.vector_store %arg8[%c0_76, %c0_77, %c0_78], %103 {strides = array<i32>} : memref<2x8x32xf32, #tpu.memory_space<vmem>>, vector<1x8x32xf32>,
    %c24_79 = arith.constant 24 : index
    %c0_80 = arith.constant 0 : index
    %104 = vector.load %arg7[%c24_79, %c0_80] : memref<80x32xf32, #tpu.memory_space<vmem>>, vector<24x32xf32>
    %cst_81 = arith.constant dense<0.000000e+00> : vector<8x32xf32>
    %105 = tpu.matmul %1, %104, %cst_81 {dimension_numbers = #tpu.dot_dimension_numbers<[1], [0], [0], [1], [0, 0, 1, 1], [], []>} : vector<8x24xf32>, vector<24x32xf32>, vector<8x32xf32> -> vector<8x32xf32>
    %c1_82 = arith.constant 1 : index
    %c0_83 = arith.constant 0 : index
    %c0_84 = arith.constant 0 : index
    %106 = vector.load %arg8[%c1_82, %c0_83, %c0_84] : memref<2x8x32xf32, #tpu.memory_space<vmem>>, vector<1x8x32xf32>
    %107 = vector.shape_cast %106 : vector<1x8x32xf32> to vector<8x32xf32>
    %108 = arith.addf %105, %107 : vector<8x32xf32>
    %109 = vector.broadcast %3 : vector<8x1xf32> to vector<8x32xf32>
    %110 = arith.addf %108, %109 : vector<8x32xf32>
    %cst_85 = arith.constant 0.000000e+00 : f32
    %111 = vector.broadcast %cst_85 : f32 to vector<8x32xf32>
    %112 = arith.maximumf %110, %111 : vector<8x32xf32>
    %c3 = arith.constant 3 : index
    %c0_86 = arith.constant 0 : index
    %c0_87 = arith.constant 0 : index
    %113 = vector.load %arg6[%c3, %c0_86, %c0_87] : memref<8x8x32xf32, #tpu.memory_space<vmem>>, vector<1x8x32xf32>
    %114 = vector.shape_cast %113 : vector<1x8x32xf32> to vector<8x32xf32>
    %115 = vector.shape_cast %112 : vector<8x32xf32> to vector<1x8x32xf32>
    tpu.vector_store %arg6[%c3, %c0_86, %c0_87], %115 {strides = array<i32>} : memref<8x8x32xf32, #tpu.memory_space<vmem>>, vector<1x8x32xf32>,
    %c40_88 = arith.constant 40 : index
    %c0_89 = arith.constant 0 : index
    %116 = vector.load %arg1[%c40_88, %c0_89] : memref<68x32xf32, #tpu.memory_space<vmem>>, vector<12x32xf32>
    %cst_90 = arith.constant dense<0.000000e+00> : vector<16x32xf32>
    %117 = tpu.matmul %0, %116, %cst_90 {dimension_numbers = #tpu.dot_dimension_numbers<[1], [0], [0], [1], [0, 0, 1, 1], [], []>} : vector<16x12xf32>, vector<12x32xf32>, vector<16x32xf32> -> vector<16x32xf32>
    %118 = vector.extract_strided_slice %117 {offsets = [0, 0], sizes = [8, 32], strides = [1, 1]} : vector<16x32xf32> to vector<8x32xf32>
    %119 = vector.broadcast %2 : vector<8x1xf32> to vector<8x32xf32>
    %120 = arith.addf %118, %119 : vector<8x32xf32>
    %cst_91 = arith.constant 0.000000e+00 : f32
    %121 = vector.broadcast %cst_91 : f32 to vector<8x32xf32>
    %122 = arith.maximumf %120, %121 : vector<8x32xf32>
    %c48 = arith.constant 48 : index
    %c0_92 = arith.constant 0 : index
    %123 = vector.load %arg7[%c48, %c0_92] : memref<80x32xf32, #tpu.memory_space<vmem>>, vector<8x32xf32>
    tpu.vector_store %arg7[%c48, %c0_92], %122 {strides = array<i32>} : memref<80x32xf32, #tpu.memory_space<vmem>>, vector<8x32xf32>,
    %124 = vector.extract_strided_slice %117 {offsets = [8, 0], sizes = [8, 32], strides = [1, 1]} : vector<16x32xf32> to vector<8x32xf32>
    %c1_93 = arith.constant 1 : index
    %c0_94 = arith.constant 0 : index
    %c0_95 = arith.constant 0 : index
    %125 = vector.load %arg8[%c1_93, %c0_94, %c0_95] : memref<2x8x32xf32, #tpu.memory_space<vmem>>, vector<1x8x32xf32>
    %126 = vector.shape_cast %125 : vector<1x8x32xf32> to vector<8x32xf32>
    %127 = vector.shape_cast %124 : vector<8x32xf32> to vector<1x8x32xf32>
    tpu.vector_store %arg8[%c1_93, %c0_94, %c0_95], %127 {strides = array<i32>} : memref<2x8x32xf32, #tpu.memory_space<vmem>>, vector<1x8x32xf32>,
    %c32_96 = arith.constant 32 : index
    %c0_97 = arith.constant 0 : index
    %128 = vector.load %arg7[%c32_96, %c0_97] : memref<80x32xf32, #tpu.memory_space<vmem>>, vector<24x32xf32>
    %cst_98 = arith.constant dense<0.000000e+00> : vector<8x32xf32>
    %129 = tpu.matmul %1, %128, %cst_98 {dimension_numbers = #tpu.dot_dimension_numbers<[1], [0], [0], [1], [0, 0, 1, 1], [], []>} : vector<8x24xf32>, vector<24x32xf32>, vector<8x32xf32> -> vector<8x32xf32>
    %c0_99 = arith.constant 0 : index
    %c0_100 = arith.constant 0 : index
    %c0_101 = arith.constant 0 : index
    %130 = vector.load %arg8[%c0_99, %c0_100, %c0_101] : memref<2x8x32xf32, #tpu.memory_space<vmem>>, vector<1x8x32xf32>
    %131 = vector.shape_cast %130 : vector<1x8x32xf32> to vector<8x32xf32>
    %132 = arith.addf %129, %131 : vector<8x32xf32>
    %133 = vector.broadcast %3 : vector<8x1xf32> to vector<8x32xf32>
    %134 = arith.addf %132, %133 : vector<8x32xf32>
    %cst_102 = arith.constant 0.000000e+00 : f32
    %135 = vector.broadcast %cst_102 : f32 to vector<8x32xf32>
    %136 = arith.maximumf %134, %135 : vector<8x32xf32>
    %c4 = arith.constant 4 : index
    %c0_103 = arith.constant 0 : index
    %c0_104 = arith.constant 0 : index
    %137 = vector.load %arg6[%c4, %c0_103, %c0_104] : memref<8x8x32xf32, #tpu.memory_space<vmem>>, vector<1x8x32xf32>
    %138 = vector.shape_cast %137 : vector<1x8x32xf32> to vector<8x32xf32>
    %139 = vector.shape_cast %136 : vector<8x32xf32> to vector<1x8x32xf32>
    tpu.vector_store %arg6[%c4, %c0_103, %c0_104], %139 {strides = array<i32>} : memref<8x8x32xf32, #tpu.memory_space<vmem>>, vector<1x8x32xf32>,
    %c48_105 = arith.constant 48 : index
    %c0_106 = arith.constant 0 : index
    %140 = vector.load %arg1[%c48_105, %c0_106] : memref<68x32xf32, #tpu.memory_space<vmem>>, vector<12x32xf32>
    %cst_107 = arith.constant dense<0.000000e+00> : vector<16x32xf32>
    %141 = tpu.matmul %0, %140, %cst_107 {dimension_numbers = #tpu.dot_dimension_numbers<[1], [0], [0], [1], [0, 0, 1, 1], [], []>} : vector<16x12xf32>, vector<12x32xf32>, vector<16x32xf32> -> vector<16x32xf32>
    %142 = vector.extract_strided_slice %141 {offsets = [0, 0], sizes = [8, 32], strides = [1, 1]} : vector<16x32xf32> to vector<8x32xf32>
    %143 = vector.broadcast %2 : vector<8x1xf32> to vector<8x32xf32>
    %144 = arith.addf %142, %143 : vector<8x32xf32>
    %cst_108 = arith.constant 0.000000e+00 : f32
    %145 = vector.broadcast %cst_108 : f32 to vector<8x32xf32>
    %146 = arith.maximumf %144, %145 : vector<8x32xf32>
    %c56 = arith.constant 56 : index
    %c0_109 = arith.constant 0 : index
    %147 = vector.load %arg7[%c56, %c0_109] : memref<80x32xf32, #tpu.memory_space<vmem>>, vector<8x32xf32>
    tpu.vector_store %arg7[%c56, %c0_109], %146 {strides = array<i32>} : memref<80x32xf32, #tpu.memory_space<vmem>>, vector<8x32xf32>,
    %148 = vector.extract_strided_slice %141 {offsets = [8, 0], sizes = [8, 32], strides = [1, 1]} : vector<16x32xf32> to vector<8x32xf32>
    %c0_110 = arith.constant 0 : index
    %c0_111 = arith.constant 0 : index
    %c0_112 = arith.constant 0 : index
    %149 = vector.load %arg8[%c0_110, %c0_111, %c0_112] : memref<2x8x32xf32, #tpu.memory_space<vmem>>, vector<1x8x32xf32>
    %150 = vector.shape_cast %149 : vector<1x8x32xf32> to vector<8x32xf32>
    %151 = vector.shape_cast %148 : vector<8x32xf32> to vector<1x8x32xf32>
    tpu.vector_store %arg8[%c0_110, %c0_111, %c0_112], %151 {strides = array<i32>} : memref<2x8x32xf32, #tpu.memory_space<vmem>>, vector<1x8x32xf32>,
    %c40_113 = arith.constant 40 : index
    %c0_114 = arith.constant 0 : index
    %152 = vector.load %arg7[%c40_113, %c0_114] : memref<80x32xf32, #tpu.memory_space<vmem>>, vector<24x32xf32>
    %cst_115 = arith.constant dense<0.000000e+00> : vector<8x32xf32>
    %153 = tpu.matmul %1, %152, %cst_115 {dimension_numbers = #tpu.dot_dimension_numbers<[1], [0], [0], [1], [0, 0, 1, 1], [], []>} : vector<8x24xf32>, vector<24x32xf32>, vector<8x32xf32> -> vector<8x32xf32>
    %c1_116 = arith.constant 1 : index
    %c0_117 = arith.constant 0 : index
    %c0_118 = arith.constant 0 : index
    %154 = vector.load %arg8[%c1_116, %c0_117, %c0_118] : memref<2x8x32xf32, #tpu.memory_space<vmem>>, vector<1x8x32xf32>
    %155 = vector.shape_cast %154 : vector<1x8x32xf32> to vector<8x32xf32>
    %156 = arith.addf %153, %155 : vector<8x32xf32>
    %157 = vector.broadcast %3 : vector<8x1xf32> to vector<8x32xf32>
    %158 = arith.addf %156, %157 : vector<8x32xf32>
    %cst_119 = arith.constant 0.000000e+00 : f32
    %159 = vector.broadcast %cst_119 : f32 to vector<8x32xf32>
    %160 = arith.maximumf %158, %159 : vector<8x32xf32>
    %c5 = arith.constant 5 : index
    %c0_120 = arith.constant 0 : index
    %c0_121 = arith.constant 0 : index
    %161 = vector.load %arg6[%c5, %c0_120, %c0_121] : memref<8x8x32xf32, #tpu.memory_space<vmem>>, vector<1x8x32xf32>
    %162 = vector.shape_cast %161 : vector<1x8x32xf32> to vector<8x32xf32>
    %163 = vector.shape_cast %160 : vector<8x32xf32> to vector<1x8x32xf32>
    tpu.vector_store %arg6[%c5, %c0_120, %c0_121], %163 {strides = array<i32>} : memref<8x8x32xf32, #tpu.memory_space<vmem>>, vector<1x8x32xf32>,
    %c56_122 = arith.constant 56 : index
    %c0_123 = arith.constant 0 : index
    %164 = vector.load %arg1[%c56_122, %c0_123] : memref<68x32xf32, #tpu.memory_space<vmem>>, vector<12x32xf32>
    %cst_124 = arith.constant dense<0.000000e+00> : vector<16x32xf32>
    %165 = tpu.matmul %0, %164, %cst_124 {dimension_numbers = #tpu.dot_dimension_numbers<[1], [0], [0], [1], [0, 0, 1, 1], [], []>} : vector<16x12xf32>, vector<12x32xf32>, vector<16x32xf32> -> vector<16x32xf32>
    %166 = vector.extract_strided_slice %165 {offsets = [0, 0], sizes = [8, 32], strides = [1, 1]} : vector<16x32xf32> to vector<8x32xf32>
    %167 = vector.broadcast %2 : vector<8x1xf32> to vector<8x32xf32>
    %168 = arith.addf %166, %167 : vector<8x32xf32>
    %cst_125 = arith.constant 0.000000e+00 : f32
    %169 = vector.broadcast %cst_125 : f32 to vector<8x32xf32>
    %170 = arith.maximumf %168, %169 : vector<8x32xf32>
    %c64 = arith.constant 64 : index
    %c0_126 = arith.constant 0 : index
    %171 = vector.load %arg7[%c64, %c0_126] : memref<80x32xf32, #tpu.memory_space<vmem>>, vector<8x32xf32>
    tpu.vector_store %arg7[%c64, %c0_126], %170 {strides = array<i32>} : memref<80x32xf32, #tpu.memory_space<vmem>>, vector<8x32xf32>,
    %172 = vector.extract_strided_slice %165 {offsets = [8, 0], sizes = [8, 32], strides = [1, 1]} : vector<16x32xf32> to vector<8x32xf32>
    %c1_127 = arith.constant 1 : index
    %c0_128 = arith.constant 0 : index
    %c0_129 = arith.constant 0 : index
    %173 = vector.load %arg8[%c1_127, %c0_128, %c0_129] : memref<2x8x32xf32, #tpu.memory_space<vmem>>, vector<1x8x32xf32>
    %174 = vector.shape_cast %173 : vector<1x8x32xf32> to vector<8x32xf32>
    %175 = vector.shape_cast %172 : vector<8x32xf32> to vector<1x8x32xf32>
    tpu.vector_store %arg8[%c1_127, %c0_128, %c0_129], %175 {strides = array<i32>} : memref<2x8x32xf32, #tpu.memory_space<vmem>>, vector<1x8x32xf32>,
    %c48_130 = arith.constant 48 : index
    %c0_131 = arith.constant 0 : index
    %176 = vector.load %arg7[%c48_130, %c0_131] : memref<80x32xf32, #tpu.memory_space<vmem>>, vector<24x32xf32>
    %cst_132 = arith.constant dense<0.000000e+00> : vector<8x32xf32>
    %177 = tpu.matmul %1, %176, %cst_132 {dimension_numbers = #tpu.dot_dimension_numbers<[1], [0], [0], [1], [0, 0, 1, 1], [], []>} : vector<8x24xf32>, vector<24x32xf32>, vector<8x32xf32> -> vector<8x32xf32>
    %c0_133 = arith.constant 0 : index
    %c0_134 = arith.constant 0 : index
    %c0_135 = arith.constant 0 : index
    %178 = vector.load %arg8[%c0_133, %c0_134, %c0_135] : memref<2x8x32xf32, #tpu.memory_space<vmem>>, vector<1x8x32xf32>
    %179 = vector.shape_cast %178 : vector<1x8x32xf32> to vector<8x32xf32>
    %180 = arith.addf %177, %179 : vector<8x32xf32>
    %181 = vector.broadcast %3 : vector<8x1xf32> to vector<8x32xf32>
    %182 = arith.addf %180, %181 : vector<8x32xf32>
    %cst_136 = arith.constant 0.000000e+00 : f32
    %183 = vector.broadcast %cst_136 : f32 to vector<8x32xf32>
    %184 = arith.maximumf %182, %183 : vector<8x32xf32>
    %c6 = arith.constant 6 : index
    %c0_137 = arith.constant 0 : index
    %c0_138 = arith.constant 0 : index
    %185 = vector.load %arg6[%c6, %c0_137, %c0_138] : memref<8x8x32xf32, #tpu.memory_space<vmem>>, vector<1x8x32xf32>
    %186 = vector.shape_cast %185 : vector<1x8x32xf32> to vector<8x32xf32>
    %187 = vector.shape_cast %184 : vector<8x32xf32> to vector<1x8x32xf32>
    tpu.vector_store %arg6[%c6, %c0_137, %c0_138], %187 {strides = array<i32>} : memref<8x8x32xf32, #tpu.memory_space<vmem>>, vector<1x8x32xf32>,
    %c56_139 = arith.constant 56 : index
    %c0_140 = arith.constant 0 : index
    %188 = vector.load %arg7[%c56_139, %c0_140] : memref<80x32xf32, #tpu.memory_space<vmem>>, vector<24x32xf32>
    %cst_141 = arith.constant dense<0.000000e+00> : vector<8x32xf32>
    %189 = tpu.matmul %1, %188, %cst_141 {dimension_numbers = #tpu.dot_dimension_numbers<[1], [0], [0], [1], [0, 0, 1, 1], [], []>} : vector<8x24xf32>, vector<24x32xf32>, vector<8x32xf32> -> vector<8x32xf32>
    %c1_142 = arith.constant 1 : index
    %c0_143 = arith.constant 0 : index
    %c0_144 = arith.constant 0 : index
    %190 = vector.load %arg8[%c1_142, %c0_143, %c0_144] : memref<2x8x32xf32, #tpu.memory_space<vmem>>, vector<1x8x32xf32>
    %191 = vector.shape_cast %190 : vector<1x8x32xf32> to vector<8x32xf32>
    %192 = arith.addf %189, %191 : vector<8x32xf32>
    %193 = vector.broadcast %3 : vector<8x1xf32> to vector<8x32xf32>
    %194 = arith.addf %192, %193 : vector<8x32xf32>
    %cst_145 = arith.constant 0.000000e+00 : f32
    %195 = vector.broadcast %cst_145 : f32 to vector<8x32xf32>
    %196 = arith.maximumf %194, %195 : vector<8x32xf32>
    %c7 = arith.constant 7 : index
    %c0_146 = arith.constant 0 : index
    %c0_147 = arith.constant 0 : index
    %197 = vector.load %arg6[%c7, %c0_146, %c0_147] : memref<8x8x32xf32, #tpu.memory_space<vmem>>, vector<1x8x32xf32>
    %198 = vector.shape_cast %197 : vector<1x8x32xf32> to vector<8x32xf32>
    %199 = vector.shape_cast %196 : vector<8x32xf32> to vector<1x8x32xf32>
    tpu.vector_store %arg6[%c7, %c0_146, %c0_147], %199 {strides = array<i32>} : memref<8x8x32xf32, #tpu.memory_space<vmem>>, vector<1x8x32xf32>,
    return
  }
  func.func @transform_0(%arg0: i32) -> (i32, i32) {
    %c0_i32 = arith.constant 0 : i32
    %c0_i32_0 = arith.constant 0 : i32
    return %c0_i32, %arg0 : i32, i32
  }
  func.func @transform_1(%arg0: i32) -> (i32, i32) {
    %c0_i32 = arith.constant 0 : i32
    %c0_i32_0 = arith.constant 0 : i32
    %c0_i32_1 = arith.constant 0 : i32
    return %c0_i32, %c0_i32_0 : i32, i32
  }
  func.func @transform_2(%arg0: i32) -> (i32, i32) {
    %c0_i32 = arith.constant 0 : i32
    %c0_i32_0 = arith.constant 0 : i32
    %c0_i32_1 = arith.constant 0 : i32
    return %c0_i32, %c0_i32_0 : i32, i32
  }
  func.func @transform_3(%arg0: i32) -> (i32, i32) {
    %c0_i32 = arith.constant 0 : i32
    %c0_i32_0 = arith.constant 0 : i32
    %c0_i32_1 = arith.constant 0 : i32
    return %c0_i32, %c0_i32_0 : i32, i32
  }
  func.func @transform_4(%arg0: i32) -> (i32, i32) {
    %c0_i32 = arith.constant 0 : i32
    %c0_i32_0 = arith.constant 0 : i32
    %c0_i32_1 = arith.constant 0 : i32
    return %c0_i32, %c0_i32_0 : i32, i32
  }
  func.func @transform_5(%arg0: i32) -> (i32, i32, i32) {
    %c0_i32 = arith.constant 0 : i32
    %c0_i32_0 = arith.constant 0 : i32
    %c0_i32_1 = arith.constant 0 : i32
    return %c0_i32, %c0_i32_0, %arg0 : i32, i32, i32
  }
}

</mosaic_0001>

<llo_original>
// kernel: res_block_conv_shortcut.1
$region0: #{res_block_conv_shortcut.1}
  #allocation0 [shape = 'u32[]', space=smem, size = 0x4, offset = 0x4, fixed_abs, tag = 'smem constant byte address 0x4 - core index']
  #allocation1 [shape = 'u32[144,128]{1,0:T(1,128)}', space=vmem, size = 0x12000, scoped, tag = 'internal scratch']
  #allocation2 [shape = 'f32[80,32]{1,0:T(8,128)}', space=vmem, size = 0xa000, scoped, tag = 'scratch operand']
  #allocation3 [shape = 'f32[2,8,32]{2,1,0:T(8,128)}', space=vmem, size = 0x2000, scoped, tag = 'scratch operand']
  %s0 = inlined_call_operand.vmem [shape: f32[68,32], index: 0, kind: input, shape index: {}]
  %s1 = inlined_call_operand.vmem [shape: f32[16,12], index: 1, kind: input, shape index: {}]
  %s2 = inlined_call_operand.vmem [shape: f32[8,24], index: 2, kind: input, shape index: {}]
  %s3 = inlined_call_operand.vmem [shape: f32[8,1], index: 3, kind: input, shape index: {}]
  %s4 = inlined_call_operand.vmem [shape: f32[8,1], index: 4, kind: input, shape index: {}]
  %s5 = inlined_call_operand.vmem [shape: f32[8,8,32], index: 5, kind: output, shape index: {}]
  %s6 = sld [smem:[#allocation0]]
  $region30: #{res_block_conv_shortcut.1} parent=0
    _
  %s8 = ssub.s32 1, %s6
  %s9 = scalar_select 0, %s8, %s6
  // Predicated region
  $region2: #{res_block_conv_shortcut.1} parent=0 // pred_check
    _
  $region3: #{res_block_conv_shortcut.1} parent=0 // pred_check_branch
    %11 = sbr.rel (0) target = $region5
  $region4: #{res_block_conv_shortcut.1} parent=0 // pred_region
    _
  $region5: #{res_block_conv_shortcut.1} parent=0 // pred_fallthru
    _
  // Predicated region
  $region6: #{res_block_conv_shortcut.1} parent=0 // pred_check
    _
  $region7: #{res_block_conv_shortcut.1} parent=0 // pred_check_branch
    %13 = sbr.rel (0) target = $region9
  $region8: #{res_block_conv_shortcut.1} parent=0 // pred_region
    _
  $region9: #{res_block_conv_shortcut.1} parent=0 // pred_fallthru
    _
  // Predicated region
  $region10: #{res_block_conv_shortcut.1} parent=0 // pred_check
    _
  $region11: #{res_block_conv_shortcut.1} parent=0 // pred_check_branch
    %15 = sbr.rel (0) target = $region13
  $region12: #{res_block_conv_shortcut.1} parent=0 // pred_region
    _
  $region13: #{res_block_conv_shortcut.1} parent=0 // pred_fallthru
    _
  // Predicated region
  $region14: #{res_block_conv_shortcut.1} parent=0 // pred_check
    _
  $region15: #{res_block_conv_shortcut.1} parent=0 // pred_check_branch
    %17 = sbr.rel (0) target = $region17
  $region16: #{res_block_conv_shortcut.1} parent=0 // pred_region
    _
  $region17: #{res_block_conv_shortcut.1} parent=0 // pred_fallthru
    _
  // Predicated region
  $region18: #{res_block_conv_shortcut.1} parent=0 // pred_check
    _
  $region19: #{res_block_conv_shortcut.1} parent=0 // pred_check_branch
    %19 = sbr.rel (0) target = $region21
  $region20: #{res_block_conv_shortcut.1} parent=0 // pred_region
    _
  $region21: #{res_block_conv_shortcut.1} parent=0 // pred_fallthru
    _
  %v20 = vld [vmem:[%s1] sm:$0xff]
  %v21 = vld [vmem:[%s1 + $0x8] sm:$0xff]
  %v22 = vld [vmem:[%s2] sm:$0xff]
  %v23 = vld [vmem:[%s3] sm:$0xff]
  %v24 = vld [vmem:[%s4] sm:$0xff]
  %vm25 = vcmask 261120
  %26 = vst.msk [vmem:[#allocation2] sm:$0xff] %vm25, 0.0
  %27 = vst.msk [vmem:[#allocation2 + $0x48] sm:$0xff] %vm25, 0.0
  %v28 = vld [vmem:[%s0] sm:$0xff]
  %v29 = vld [vmem:[%s0 + $0x8] sm:$0xf]
  %vm30 = vcmask 97280
  %v32 = vsel %vm30, %v20, 0
  %v35 = vsel %vm30, %v21, 0
  %vm37 = vcmask 1043456
  %v39 = vsel %vm37, %v29, 0
  %41 = vmatprep.subr.mxu0 0.0
  %42 = vmatpush1.msra.mxu0 %v28
  %43 = vmatprep.subr.mxu0 0.0
  %44 = vmatpush1.msra.mxu0 %v39
  %45 = vmatprep.subr.mxu0 0.0
  %46 = vmatpush1.msra.mxu0 0.0
  %47 = vmatprep.subr.mxu0 0.0
  %48 = vmatpush1.msra.mxu0 0.0
  %49 = vmatprep.subr.mxu0 0.0
  %50 = vmatpush1.msra.mxu0 0.0
  %51 = vmatprep.subr.mxu0 0.0
  %52 = vmatpush1.msra.mxu0 0.0
  %53 = vmatprep.subr.mxu0 0.0
  %54 = vmatpush1.msra.mxu0 0.0
  %55 = vmatprep.subr.mxu0 0.0
  %56 = vmatpush1.msra.mxu0 0.0
  %57 = vmatprep.subr.mxu0 0.0
  %58 = vmatpush1.msra.mxu0 0.0
  %59 = vmatprep.subr.mxu0 0.0
  %60 = vmatpush1.msra.mxu0 0.0
  %61 = vmatprep.subr.mxu0 0.0
  %62 = vmatpush1.msra.mxu0 0.0
  %63 = vmatprep.subr.mxu0 0.0
  %64 = vmatpush1.msra.mxu0 0.0
  %65 = vmatprep.subr.mxu0 0.0
  %66 = vmatpush1.msra.mxu0 0.0
  %67 = vmatprep.subr.mxu0 0.0
  %68 = vmatpush1.msra.mxu0 0.0
  %69 = vmatprep.subr.mxu0 0.0
  %70 = vmatpush1.msra.mxu0 0.0
  %71 = vmatprep.subr.mxu0 0.0
  %72 = vmatpush1.msra.mxu0 0.0
  %73 = vmatprep.subr.mxu0 0.0
  %74 = vmatpush1.msra.mxu0 0.0
  %75 = vmatprep.subr.mxu0 0.0
  %76 = vmatpush1.msra.mxu0 0.0
  %77 = vmatprep.subr.mxu0 0.0
  %78 = vmatpush1.msra.mxu0 0.0
  %79 = vmatprep.subr.mxu0 0.0
  %80 = vmatpush1.msra.mxu0 0.0
  %81 = vmatprep.subr.mxu0 0.0
  %82 = vmatpush1.msra.mxu0 0.0
  %83 = vmatprep.subr.mxu0 0.0
  %84 = vmatpush1.msra.mxu0 0.0
  %85 = vmatprep.subr.mxu0 0.0
  %86 = vmatpush1.msra.mxu0 0.0
  %87 = vmatprep.subr.mxu0 0.0
  %88 = vmatpush1.msra.mxu0 0.0
  %89 = vmatprep.subr.mxu0 0.0
  %90 = vmatpush1.msra.mxu0 0.0
  %91 = vmatprep.subr.mxu0 0.0
  %92 = vmatpush1.msra.mxu0 0.0
  %93 = vmatprep.subr.mxu0 0.0
  %94 = vmatpush1.msra.mxu0 0.0
  %95 = vmatprep.subr.mxu0 0.0
  %96 = vmatpush1.msra.mxu0 0.0
  %97 = vmatprep.subr.mxu0 0.0
  %98 = vmatpush1.msra.mxu0 0.0
  %99 = vmatprep.subr.mxu0 0.0
  %100 = vmatpush1.msra.mxu0 0.0
  %101 = vmatprep.subr.mxu0 0.0
  %102 = vmatpush1.msra.mxu0 0.0
  %103 = vmatprep.subr.mxu0 0.0
  %104 = vmatpush1.msra.mxu0 0.0
  %105 = vmatprep.mubr.f32.mxu0 0.0
  %106 = vmatmul.mubr.f32.gmra.mrb[0].mxu0 %v32
  %v107 = vpop.f32.mrb[0].mxu0
  %v108 = vadd.f32 0.0, %v107
  %v109 = vpop.f32.mrb[0].mxu0
  %110 = vmatprep.mubr.f32.mxu0 0.0
  %111 = vmatmul.mubr.f32.gmra.mrb[0].mxu0 %v35
  %v112 = vpop.f32.mrb[0].mxu0
  %v113 = vadd.f32 0.0, %v112
  %v114 = vpop.f32.mrb[0].mxu0
  %115 = vdwg.mxu0
  %117 = vset.pattern.permute.xlu0 0
  %118 = vperm.xlu0 %117, %v23
  %v119 = vpop.permute.xlu0 %118
  %v121 = vadd.f32 %v108, %v119
  %v122 = vmax.f32 %v121, 0.0
  %123 = vst.msk [vmem:[#allocation2 + $0x8] sm:$0xff] %vm25, %v122
  %124 = vst.msk [vmem:[#allocation3] sm:$0xff] %vm25, %v113
  %v125 = vld [vmem:[%s0 + $0x8] sm:$0xff]
  %v126 = vld [vmem:[%s0 + $0x10] sm:$0xf]
  %v128 = vsel %vm37, %v126, 0
  %130 = vmatprep.subr.mxu0 0.0
  %131 = vmatpush1.msra.mxu0 %v125
  %132 = vmatprep.subr.mxu0 0.0
  %133 = vmatpush1.msra.mxu0 %v128
  %134 = vmatprep.subr.mxu0 0.0
  %135 = vmatpush1.msra.mxu0 0.0
  %136 = vmatprep.subr.mxu0 0.0
  %137 = vmatpush1.msra.mxu0 0.0
  %138 = vmatprep.subr.mxu0 0.0
  %139 = vmatpush1.msra.mxu0 0.0
  %140 = vmatprep.subr.mxu0 0.0
  %141 = vmatpush1.msra.mxu0 0.0
  %142 = vmatprep.subr.mxu0 0.0
  %143 = vmatpush1.msra.mxu0 0.0
  %144 = vmatprep.subr.mxu0 0.0
  %145 = vmatpush1.msra.mxu0 0.0
  %146 = vmatprep.subr.mxu0 0.0
  %147 = vmatpush1.msra.mxu0 0.0
  %148 = vmatprep.subr.mxu0 0.0
  %149 = vmatpush1.msra.mxu0 0.0
  %150 = vmatprep.subr.mxu0 0.0
  %151 = vmatpush1.msra.mxu0 0.0
  %152 = vmatprep.subr.mxu0 0.0
  %153 = vmatpush1.msra.mxu0 0.0
  %154 = vmatprep.subr.mxu0 0.0
  %155 = vmatpush1.msra.mxu0 0.0
  %156 = vmatprep.subr.mxu0 0.0
  %157 = vmatpush1.msra.mxu0 0.0
  %158 = vmatprep.subr.mxu0 0.0
  %159 = vmatpush1.msra.mxu0 0.0
  %160 = vmatprep.subr.mxu0 0.0
  %161 = vmatpush1.msra.mxu0 0.0
  %162 = vmatprep.subr.mxu0 0.0
  %163 = vmatpush1.msra.mxu0 0.0
  %164 = vmatprep.subr.mxu0 0.0
  %165 = vmatpush1.msra.mxu0 0.0
  %166 = vmatprep.subr.mxu0 0.0
  %167 = vmatpush1.msra.mxu0 0.0
  %168 = vmatprep.subr.mxu0 0.0
  %169 = vmatpush1.msra.mxu0 0.0
  %170 = vmatprep.subr.mxu0 0.0
  %171 = vmatpush1.msra.mxu0 0.0
  %172 = vmatprep.subr.mxu0 0.0
  %173 = vmatpush1.msra.mxu0 0.0
  %174 = vmatprep.subr.mxu0 0.0
  %175 = vmatpush1.msra.mxu0 0.0
  %176 = vmatprep.subr.mxu0 0.0
  %177 = vmatpush1.msra.mxu0 0.0
  %178 = vmatprep.subr.mxu0 0.0
  %179 = vmatpush1.msra.mxu0 0.0
  %180 = vmatprep.subr.mxu0 0.0
  %181 = vmatpush1.msra.mxu0 0.0
  %182 = vmatprep.subr.mxu0 0.0
  %183 = vmatpush1.msra.mxu0 0.0
  %184 = vmatprep.subr.mxu0 0.0
  %185 = vmatpush1.msra.mxu0 0.0
  %186 = vmatprep.subr.mxu0 0.0
  %187 = vmatpush1.msra.mxu0 0.0
  %188 = vmatprep.subr.mxu0 0.0
  %189 = vmatpush1.msra.mxu0 0.0
  %190 = vmatprep.subr.mxu0 0.0
  %191 = vmatpush1.msra.mxu0 0.0
  %192 = vmatprep.subr.mxu0 0.0
  %193 = vmatpush1.msra.mxu0 0.0
  %194 = vmatprep.mubr.f32.mxu0 0.0
  %195 = vmatmul.mubr.f32.gmra.mrb[0].mxu0 %v32
  %v196 = vpop.f32.mrb[0].mxu0
  %v197 = vadd.f32 0.0, %v196
  %v198 = vpop.f32.mrb[0].mxu0
  %199 = vmatprep.mubr.f32.mxu0 0.0
  %200 = vmatmul.mubr.f32.gmra.mrb[0].mxu0 %v35
  %v201 = vpop.f32.mrb[0].mxu0
  %v202 = vadd.f32 0.0, %v201
  %v203 = vpop.f32.mrb[0].mxu0
  %204 = vdwg.mxu0
  %v205 = vadd.f32 %v197, %v119
  %v206 = vmax.f32 %v205, 0.0
  %207 = vst.msk [vmem:[#allocation2 + $0x10] sm:$0xff] %vm25, %v206
  %s208 = scalar_lea.vmem [#allocation3], 8
  %209 = vst.msk [vmem:[%s208] sm:$0xff] %vm25, %v202
  %v210 = vld [vmem:[#allocation2] sm:$0xff]
  %v211 = vld [vmem:[#allocation2 + $0x8] sm:$0xff]
  %v212 = vld [vmem:[#allocation2 + $0x10] sm:$0xff]
  %v213 = vld [vmem:[#allocation3] sm:$0xff]
  %vm214 = vcmask 195584
  %v216 = vsel %vm214, %v22, 0
  %218 = vmatprep.subr.mxu0 0.0
  %219 = vmatpush1.msra.mxu0 %v210
  %220 = vmatprep.subr.mxu0 0.0
  %221 = vmatpush1.msra.mxu0 %v211
  %222 = vmatprep.subr.mxu0 0.0
  %223 = vmatpush1.msra.mxu0 %v212
  %224 = vmatprep.subr.mxu0 0.0
  %225 = vmatpush1.msra.mxu0 0.0
  %226 = vmatprep.subr.mxu0 0.0
  %227 = vmatpush1.msra.mxu0 0.0
  %228 = vmatprep.subr.mxu0 0.0
  %229 = vmatpush1.msra.mxu0 0.0
  %230 = vmatprep.subr.mxu0 0.0
  %231 = vmatpush1.msra.mxu0 0.0
  %232 = vmatprep.subr.mxu0 0.0
  %233 = vmatpush1.msra.mxu0 0.0
  %234 = vmatprep.subr.mxu0 0.0
  %235 = vmatpush1.msra.mxu0 0.0
  %236 = vmatprep.subr.mxu0 0.0
  %237 = vmatpush1.msra.mxu0 0.0
  %238 = vmatprep.subr.mxu0 0.0
  %239 = vmatpush1.msra.mxu0 0.0
  %240 = vmatprep.subr.mxu0 0.0
  %241 = vmatpush1.msra.mxu0 0.0
  %242 = vmatprep.subr.mxu0 0.0
  %243 = vmatpush1.msra.mxu0 0.0
  %244 = vmatprep.subr.mxu0 0.0
  %245 = vmatpush1.msra.mxu0 0.0
  %246 = vmatprep.subr.mxu0 0.0
  %247 = vmatpush1.msra.mxu0 0.0
  %248 = vmatprep.subr.mxu0 0.0
  %249 = vmatpush1.msra.mxu0 0.0
  %250 = vmatprep.subr.mxu0 0.0
  %251 = vmatpush1.msra.mxu0 0.0
  %252 = vmatprep.subr.mxu0 0.0
  %253 = vmatpush1.msra.mxu0 0.0
  %254 = vmatprep.subr.mxu0 0.0
  %255 = vmatpush1.msra.mxu0 0.0
  %256 = vmatprep.subr.mxu0 0.0
  %257 = vmatpush1.msra.mxu0 0.0
  %258 = vmatprep.subr.mxu0 0.0
  %259 = vmatpush1.msra.mxu0 0.0
  %260 = vmatprep.subr.mxu0 0.0
  %261 = vmatpush1.msra.mxu0 0.0
  %262 = vmatprep.subr.mxu0 0.0
  %263 = vmatpush1.msra.mxu0 0.0
  %264 = vmatprep.subr.mxu0 0.0
  %265 = vmatpush1.msra.mxu0 0.0
  %266 = vmatprep.subr.mxu0 0.0
  %267 = vmatpush1.msra.mxu0 0.0
  %268 = vmatprep.subr.mxu0 0.0
  %269 = vmatpush1.msra.mxu0 0.0
  %270 = vmatprep.subr.mxu0 0.0
  %271 = vmatpush1.msra.mxu0 0.0
  %272 = vmatprep.subr.mxu0 0.0
  %273 = vmatpush1.msra.mxu0 0.0
  %274 = vmatprep.subr.mxu0 0.0
  %275 = vmatpush1.msra.mxu0 0.0
  %276 = vmatprep.subr.mxu0 0.0
  %277 = vmatpush1.msra.mxu0 0.0
  %278 = vmatprep.subr.mxu0 0.0
  %279 = vmatpush1.msra.mxu0 0.0
  %280 = vmatprep.subr.mxu0 0.0
  %281 = vmatpush1.msra.mxu0 0.0
  %282 = vmatprep.mubr.f32.mxu0 0.0
  %283 = vmatmul.mubr.f32.gmra.mrb[0].mxu0 %v216
  %v284 = vpop.f32.mrb[0].mxu0
  %v285 = vadd.f32 %v213, %v284
  %v286 = vpop.f32.mrb[0].mxu0
  %287 = vdwg.mxu0
  %289 = vset.pattern.permute.xlu0 0
  %290 = vperm.xlu0 %289, %v24
  %v291 = vpop.permute.xlu0 %290
  %v293 = vadd.f32 %v285, %v291
  %v294 = vmax.f32 %v293, 0.0
  %295 = vst.msk [vmem:[%s5] sm:$0xff] %vm25, %v294
  %v296 = vld [vmem:[%s0 + $0x10] sm:$0xff]
  %v297 = vld [vmem:[%s0 + $0x18] sm:$0xf]
  %v299 = vsel %vm37, %v297, 0
  %301 = vmatprep.subr.mxu0 0.0
  %302 = vmatpush1.msra.mxu0 %v296
  %303 = vmatprep.subr.mxu0 0.0
  %304 = vmatpush1.msra.mxu0 %v299
  %305 = vmatprep.subr.mxu0 0.0
  %306 = vmatpush1.msra.mxu0 0.0
  %307 = vmatprep.subr.mxu0 0.0
  %308 = vmatpush1.msra.mxu0 0.0
  %309 = vmatprep.subr.mxu0 0.0
  %310 = vmatpush1.msra.mxu0 0.0
  %311 = vmatprep.subr.mxu0 0.0
  %312 = vmatpush1.msra.mxu0 0.0
  %313 = vmatprep.subr.mxu0 0.0
  %314 = vmatpush1.msra.mxu0 0.0
  %315 = vmatprep.subr.mxu0 0.0
  %316 = vmatpush1.msra.mxu0 0.0
  %317 = vmatprep.subr.mxu0 0.0
  %318 = vmatpush1.msra.mxu0 0.0
  %319 = vmatprep.subr.mxu0 0.0
  %320 = vmatpush1.msra.mxu0 0.0
  %321 = vmatprep.subr.mxu0 0.0
  %322 = vmatpush1.msra.mxu0 0.0
  %323 = vmatprep.subr.mxu0 0.0
  %324 = vmatpush1.msra.mxu0 0.0
  %325 = vmatprep.subr.mxu0 0.0
  %326 = vmatpush1.msra.mxu0 0.0
  %327 = vmatprep.subr.mxu0 0.0
  %328 = vmatpush1.msra.mxu0 0.0
  %329 = vmatprep.subr.mxu0 0.0
  %330 = vmatpush1.msra.mxu0 0.0
  %331 = vmatprep.subr.mxu0 0.0
  %332 = vmatpush1.msra.mxu0 0.0
  %333 = vmatprep.subr.mxu0 0.0
  %334 = vmatpush1.msra.mxu0 0.0
  %335 = vmatprep.subr.mxu0 0.0
  %336 = vmatpush1.msra.mxu0 0.0
  %337 = vmatprep.subr.mxu0 0.0
  %338 = vmatpush1.msra.mxu0 0.0
  %339 = vmatprep.subr.mxu0 0.0
  %340 = vmatpush1.msra.mxu0 0.0
  %341 = vmatprep.subr.mxu0 0.0
  %342 = vmatpush1.msra.mxu0 0.0
  %343 = vmatprep.subr.mxu0 0.0
  %344 = vmatpush1.msra.mxu0 0.0
  %345 = vmatprep.subr.mxu0 0.0
  %346 = vmatpush1.msra.mxu0 0.0
  %347 = vmatprep.subr.mxu0 0.0
  %348 = vmatpush1.msra.mxu0 0.0
  %349 = vmatprep.subr.mxu0 0.0
  %350 = vmatpush1.msra.mxu0 0.0
  %351 = vmatprep.subr.mxu0 0.0
  %352 = vmatpush1.msra.mxu0 0.0
  %353 = vmatprep.subr.mxu0 0.0
  %354 = vmatpush1.msra.mxu0 0.0
  %355 = vmatprep.subr.mxu0 0.0
  %356 = vmatpush1.msra.mxu0 0.0
  %357 = vmatprep.subr.mxu0 0.0
  %358 = vmatpush1.msra.mxu0 0.0
  %359 = vmatprep.subr.mxu0 0.0
  %360 = vmatpush1.msra.mxu0 0.0
  %361 = vmatprep.subr.mxu0 0.0
  %362 = vmatpush1.msra.mxu0 0.0
  %363 = vmatprep.subr.mxu0 0.0
  %364 = vmatpush1.msra.mxu0 0.0
  %365 = vmatprep.mubr.f32.mxu0 0.0
  %366 = vmatmul.mubr.f32.gmra.mrb[0].mxu0 %v32
  %v367 = vpop.f32.mrb[0].mxu0
  %v368 = vadd.f32 0.0, %v367
  %v369 = vpop.f32.mrb[0].mxu0
  %370 = vmatprep.mubr.f32.mxu0 0.0
  %371 = vmatmul.mubr.f32.gmra.mrb[0].mxu0 %v35
  %v372 = vpop.f32.mrb[0].mxu0
  %v373 = vadd.f32 0.0, %v372
  %v374 = vpop.f32.mrb[0].mxu0
  %375 = vdwg.mxu0
  %v376 = vadd.f32 %v368, %v119
  %v377 = vmax.f32 %v376, 0.0
  %378 = vst.msk [vmem:[#allocation2 + $0x18] sm:$0xff] %vm25, %v377
  %379 = vst.msk [vmem:[#allocation3] sm:$0xff] %vm25, %v373
  %v380 = vld [vmem:[#allocation2 + $0x8] sm:$0xff]
  %v381 = vld [vmem:[#allocation2 + $0x10] sm:$0xff]
  %v382 = vld [vmem:[#allocation2 + $0x18] sm:$0xff]
  %v383 = vld [vmem:[%s208] sm:$0xff]
  %384 = vmatprep.subr.mxu0 0.0
  %385 = vmatpush1.msra.mxu0 %v380
  %386 = vmatprep.subr.mxu0 0.0
  %387 = vmatpush1.msra.mxu0 %v381
  %388 = vmatprep.subr.mxu0 0.0
  %389 = vmatpush1.msra.mxu0 %v382
  %390 = vmatprep.subr.mxu0 0.0
  %391 = vmatpush1.msra.mxu0 0.0
  %392 = vmatprep.subr.mxu0 0.0
  %393 = vmatpush1.msra.mxu0 0.0
  %394 = vmatprep.subr.mxu0 0.0
  %395 = vmatpush1.msra.mxu0 0.0
  %396 = vmatprep.subr.mxu0 0.0
  %397 = vmatpush1.msra.mxu0 0.0
  %398 = vmatprep.subr.mxu0 0.0
  %399 = vmatpush1.msra.mxu0 0.0
  %400 = vmatprep.subr.mxu0 0.0
  %401 = vmatpush1.msra.mxu0 0.0
  %402 = vmatprep.subr.mxu0 0.0
  %403 = vmatpush1.msra.mxu0 0.0
  %404 = vmatprep.subr.mxu0 0.0
  %405 = vmatpush1.msra.mxu0 0.0
  %406 = vmatprep.subr.mxu0 0.0
  %407 = vmatpush1.msra.mxu0 0.0
  %408 = vmatprep.subr.mxu0 0.0
  %409 = vmatpush1.msra.mxu0 0.0
  %410 = vmatprep.subr.mxu0 0.0
  %411 = vmatpush1.msra.mxu0 0.0
  %412 = vmatprep.subr.mxu0 0.0
  %413 = vmatpush1.msra.mxu0 0.0
  %414 = vmatprep.subr.mxu0 0.0
  %415 = vmatpush1.msra.mxu0 0.0
  %416 = vmatprep.subr.mxu0 0.0
  %417 = vmatpush1.msra.mxu0 0.0
  %418 = vmatprep.subr.mxu0 0.0
  %419 = vmatpush1.msra.mxu0 0.0
  %420 = vmatprep.subr.mxu0 0.0
  %421 = vmatpush1.msra.mxu0 0.0
  %422 = vmatprep.subr.mxu0 0.0
  %423 = vmatpush1.msra.mxu0 0.0
  %424 = vmatprep.subr.mxu0 0.0
  %425 = vmatpush1.msra.mxu0 0.0
  %426 = vmatprep.subr.mxu0 0.0
  %427 = vmatpush1.msra.mxu0 0.0
  %428 = vmatprep.subr.mxu0 0.0
  %429 = vmatpush1.msra.mxu0 0.0
  %430 = vmatprep.subr.mxu0 0.0
  %431 = vmatpush1.msra.mxu0 0.0
  %432 = vmatprep.subr.mxu0 0.0
  %433 = vmatpush1.msra.mxu0 0.0
  %434 = vmatprep.subr.mxu0 0.0
  %435 = vmatpush1.msra.mxu0 0.0
  %436 = vmatprep.subr.mxu0 0.0
  %437 = vmatpush1.msra.mxu0 0.0
  %438 = vmatprep.subr.mxu0 0.0
  %439 = vmatpush1.msra.mxu0 0.0
  %440 = vmatprep.subr.mxu0 0.0
  %441 = vmatpush1.msra.mxu0 0.0
  %442 = vmatprep.subr.mxu0 0.0
  %443 = vmatpush1.msra.mxu0 0.0
  %444 = vmatprep.subr.mxu0 0.0
  %445 = vmatpush1.msra.mxu0 0.0
  %446 = vmatprep.subr.mxu0 0.0
  %447 = vmatpush1.msra.mxu0 0.0
  %448 = vmatprep.mubr.f32.mxu0 0.0
  %449 = vmatmul.mubr.f32.gmra.mrb[0].mxu0 %v216
  %v450 = vpop.f32.mrb[0].mxu0
  %v451 = vadd.f32 %v383, %v450
  %v452 = vpop.f32.mrb[0].mxu0
  %453 = vdwg.mxu0
  %v454 = vadd.f32 %v451, %v291
  %v455 = vmax.f32 %v454, 0.0
  %s456 = scalar_lea.vmem %s5, 8
  %457 = vst.msk [vmem:[%s456] sm:$0xff] %vm25, %v455
  %v458 = vld [vmem:[%s0 + $0x18] sm:$0xff]
  %v459 = vld [vmem:[%s0 + $0x20] sm:$0xf]
  %v461 = vsel %vm37, %v459, 0
  %463 = vmatprep.subr.mxu0 0.0
  %464 = vmatpush1.msra.mxu0 %v458
  %465 = vmatprep.subr.mxu0 0.0
  %466 = vmatpush1.msra.mxu0 %v461
  %467 = vmatprep.subr.mxu0 0.0
  %468 = vmatpush1.msra.mxu0 0.0
  %469 = vmatprep.subr.mxu0 0.0
  %470 = vmatpush1.msra.mxu0 0.0
  %471 = vmatprep.subr.mxu0 0.0
  %472 = vmatpush1.msra.mxu0 0.0
  %473 = vmatprep.subr.mxu0 0.0
  %474 = vmatpush1.msra.mxu0 0.0
  %475 = vmatprep.subr.mxu0 0.0
  %476 = vmatpush1.msra.mxu0 0.0
  %477 = vmatprep.subr.mxu0 0.0
  %478 = vmatpush1.msra.mxu0 0.0
  %479 = vmatprep.subr.mxu0 0.0
  %480 = vmatpush1.msra.mxu0 0.0
  %481 = vmatprep.subr.mxu0 0.0
  %482 = vmatpush1.msra.mxu0 0.0
  %483 = vmatprep.subr.mxu0 0.0
  %484 = vmatpush1.msra.mxu0 0.0
  %485 = vmatprep.subr.mxu0 0.0
  %486 = vmatpush1.msra.mxu0 0.0
  %487 = vmatprep.subr.mxu0 0.0
  %488 = vmatpush1.msra.mxu0 0.0
  %489 = vmatprep.subr.mxu0 0.0
  %490 = vmatpush1.msra.mxu0 0.0
  %491 = vmatprep.subr.mxu0 0.0
  %492 = vmatpush1.msra.mxu0 0.0
  %493 = vmatprep.subr.mxu0 0.0
  %494 = vmatpush1.msra.mxu0 0.0
  %495 = vmatprep.subr.mxu0 0.0
  %496 = vmatpush1.msra.mxu0 0.0
  %497 = vmatprep.subr.mxu0 0.0
  %498 = vmatpush1.msra.mxu0 0.0
  %499 = vmatprep.subr.mxu0 0.0
  %500 = vmatpush1.msra.mxu0 0.0
  %501 = vmatprep.subr.mxu0 0.0
  %502 = vmatpush1.msra.mxu0 0.0
  %503 = vmatprep.subr.mxu0 0.0
  %504 = vmatpush1.msra.mxu0 0.0
  %505 = vmatprep.subr.mxu0 0.0
  %506 = vmatpush1.msra.mxu0 0.0
  %507 = vmatprep.subr.mxu0 0.0
  %508 = vmatpush1.msra.mxu0 0.0
  %509 = vmatprep.subr.mxu0 0.0
  %510 = vmatpush1.msra.mxu0 0.0
  %511 = vmatprep.subr.mxu0 0.0
  %512 = vmatpush1.msra.mxu0 0.0
  %513 = vmatprep.subr.mxu0 0.0
  %514 = vmatpush1.msra.mxu0 0.0
  %515 = vmatprep.subr.mxu0 0.0
  %516 = vmatpush1.msra.mxu0 0.0
  %517 = vmatprep.subr.mxu0 0.0
  %518 = vmatpush1.msra.mxu0 0.0
  %519 = vmatprep.subr.mxu0 0.0
  %520 = vmatpush1.msra.mxu0 0.0
  %521 = vmatprep.subr.mxu0 0.0
  %522 = vmatpush1.msra.mxu0 0.0
  %523 = vmatprep.subr.mxu0 0.0
  %524 = vmatpush1.msra.mxu0 0.0
  %525 = vmatprep.subr.mxu0 0.0
  %526 = vmatpush1.msra.mxu0 0.0
  %527 = vmatprep.mubr.f32.mxu0 0.0
  %528 = vmatmul.mubr.f32.gmra.mrb[0].mxu0 %v32
  %v529 = vpop.f32.mrb[0].mxu0
  %v530 = vadd.f32 0.0, %v529
  %v531 = vpop.f32.mrb[0].mxu0
  %532 = vmatprep.mubr.f32.mxu0 0.0
  %533 = vmatmul.mubr.f32.gmra.mrb[0].mxu0 %v35
  %v534 = vpop.f32.mrb[0].mxu0
  %v535 = vadd.f32 0.0, %v534
  %v536 = vpop.f32.mrb[0].mxu0
  %537 = vdwg.mxu0
  %v538 = vadd.f32 %v530, %v119
  %v539 = vmax.f32 %v538, 0.0
  %540 = vst.msk [vmem:[#allocation2 + $0x20] sm:$0xff] %vm25, %v539
  %541 = vst.msk [vmem:[%s208] sm:$0xff] %vm25, %v535
  %v542 = vld [vmem:[#allocation2 + $0x10] sm:$0xff]
  %v543 = vld [vmem:[#allocation2 + $0x18] sm:$0xff]
  %v544 = vld [vmem:[#allocation2 + $0x20] sm:$0xff]
  %v545 = vld [vmem:[#allocation3] sm:$0xff]
  %546 = vmatprep.subr.mxu0 0.0
  %547 = vmatpush1.msra.mxu0 %v542
  %548 = vmatprep.subr.mxu0 0.0
  %549 = vmatpush1.msra.mxu0 %v543
  %550 = vmatprep.subr.mxu0 0.0
  %551 = vmatpush1.msra.mxu0 %v544
  %552 = vmatprep.subr.mxu0 0.0
  %553 = vmatpush1.msra.mxu0 0.0
  %554 = vmatprep.subr.mxu0 0.0
  %555 = vmatpush1.msra.mxu0 0.0
  %556 = vmatprep.subr.mxu0 0.0
  %557 = vmatpush1.msra.mxu0 0.0
  %558 = vmatprep.subr.mxu0 0.0
  %559 = vmatpush1.msra.mxu0 0.0
  %560 = vmatprep.subr.mxu0 0.0
  %561 = vmatpush1.msra.mxu0 0.0
  %562 = vmatprep.subr.mxu0 0.0
  %563 = vmatpush1.msra.mxu0 0.0
  %564 = vmatprep.subr.mxu0 0.0
  %565 = vmatpush1.msra.mxu0 0.0
  %566 = vmatprep.subr.mxu0 0.0
  %567 = vmatpush1.msra.mxu0 0.0
  %568 = vmatprep.subr.mxu0 0.0
  %569 = vmatpush1.msra.mxu0 0.0
  %570 = vmatprep.subr.mxu0 0.0
  %571 = vmatpush1.msra.mxu0 0.0
  %572 = vmatprep.subr.mxu0 0.0
  %573 = vmatpush1.msra.mxu0 0.0
  %574 = vmatprep.subr.mxu0 0.0
  %575 = vmatpush1.msra.mxu0 0.0
  %576 = vmatprep.subr.mxu0 0.0
  %577 = vmatpush1.msra.mxu0 0.0
  %578 = vmatprep.subr.mxu0 0.0
  %579 = vmatpush1.msra.mxu0 0.0
  %580 = vmatprep.subr.mxu0 0.0
  %581 = vmatpush1.msra.mxu0 0.0
  %582 = vmatprep.subr.mxu0 0.0
  %583 = vmatpush1.msra.mxu0 0.0
  %584 = vmatprep.subr.mxu0 0.0
  %585 = vmatpush1.msra.mxu0 0.0
  %586 = vmatprep.subr.mxu0 0.0
  %587 = vmatpush1.msra.mxu0 0.0
  %588 = vmatprep.subr.mxu0 0.0
  %589 = vmatpush1.msra.mxu0 0.0
  %590 = vmatprep.subr.mxu0 0.0
  %591 = vmatpush1.msra.mxu0 0.0
  %592 = vmatprep.subr.mxu0 0.0
  %593 = vmatpush1.msra.mxu0 0.0
  %594 = vmatprep.subr.mxu0 0.0
  %595 = vmatpush1.msra.mxu0 0.0
  %596 = vmatprep.subr.mxu0 0.0
  %597 = vmatpush1.msra.mxu0 0.0
  %598 = vmatprep.subr.mxu0 0.0
  %599 = vmatpush1.msra.mxu0 0.0
  %600 = vmatprep.subr.mxu0 0.0
  %601 = vmatpush1.msra.mxu0 0.0
  %602 = vmatprep.subr.mxu0 0.0
  %603 = vmatpush1.msra.mxu0 0.0
  %604 = vmatprep.subr.mxu0 0.0
  %605 = vmatpush1.msra.mxu0 0.0
  %606 = vmatprep.subr.mxu0 0.0
  %607 = vmatpush1.msra.mxu0 0.0
  %608 = vmatprep.subr.mxu0 0.0
  %609 = vmatpush1.msra.mxu0 0.0
  %610 = vmatprep.mubr.f32.mxu0 0.0
  %611 = vmatmul.mubr.f32.gmra.mrb[0].mxu0 %v216
  %v612 = vpop.f32.mrb[0].mxu0
  %v613 = vadd.f32 %v545, %v612
  %v614 = vpop.f32.mrb[0].mxu0
  %615 = vdwg.mxu0
  %v616 = vadd.f32 %v613, %v291
  %v617 = vmax.f32 %v616, 0.0
  %s618 = scalar_lea.vmem %s5, 16
  %619 = vst.msk [vmem:[%s618] sm:$0xff] %vm25, %v617
  %v620 = vld [vmem:[%s0 + $0x20] sm:$0xff]
  %v621 = vld [vmem:[%s0 + $0x28] sm:$0xf]
  %v623 = vsel %vm37, %v621, 0
  %625 = vmatprep.subr.mxu0 0.0
  %626 = vmatpush1.msra.mxu0 %v620
  %627 = vmatprep.subr.mxu0 0.0
  %628 = vmatpush1.msra.mxu0 %v623
  %629 = vmatprep.subr.mxu0 0.0
  %630 = vmatpush1.msra.mxu0 0.0
  %631 = vmatprep.subr.mxu0 0.0
  %632 = vmatpush1.msra.mxu0 0.0
  %633 = vmatprep.subr.mxu0 0.0
  %634 = vmatpush1.msra.mxu0 0.0
  %635 = vmatprep.subr.mxu0 0.0
  %636 = vmatpush1.msra.mxu0 0.0
  %637 = vmatprep.subr.mxu0 0.0
  %638 = vmatpush1.msra.mxu0 0.0
  %639 = vmatprep.subr.mxu0 0.0
  %640 = vmatpush1.msra.mxu0 0.0
  %641 = vmatprep.subr.mxu0 0.0
  %642 = vmatpush1.msra.mxu0 0.0
  %643 = vmatprep.subr.mxu0 0.0
  %644 = vmatpush1.msra.mxu0 0.0
  %645 = vmatprep.subr.mxu0 0.0
  %646 = vmatpush1.msra.mxu0 0.0
  %647 = vmatprep.subr.mxu0 0.0
  %648 = vmatpush1.msra.mxu0 0.0
  %649 = vmatprep.subr.mxu0 0.0
  %650 = vmatpush1.msra.mxu0 0.0
  %651 = vmatprep.subr.mxu0 0.0
  %652 = vmatpush1.msra.mxu0 0.0
  %653 = vmatprep.subr.mxu0 0.0
  %654 = vmatpush1.msra.mxu0 0.0
  %655 = vmatprep.subr.mxu0 0.0
  %656 = vmatpush1.msra.mxu0 0.0
  %657 = vmatprep.subr.mxu0 0.0
  %658 = vmatpush1.msra.mxu0 0.0
  %659 = vmatprep.subr.mxu0 0.0
  %660 = vmatpush1.msra.mxu0 0.0
  %661 = vmatprep.subr.mxu0 0.0
  %662 = vmatpush1.msra.mxu0 0.0
  %663 = vmatprep.subr.mxu0 0.0
  %664 = vmatpush1.msra.mxu0 0.0
  %665 = vmatprep.subr.mxu0 0.0
  %666 = vmatpush1.msra.mxu0 0.0
  %667 = vmatprep.subr.mxu0 0.0
  %668 = vmatpush1.msra.mxu0 0.0
  %669 = vmatprep.subr.mxu0 0.0
  %670 = vmatpush1.msra.mxu0 0.0
  %671 = vmatprep.subr.mxu0 0.0
  %672 = vmatpush1.msra.mxu0 0.0
  %673 = vmatprep.subr.mxu0 0.0
  %674 = vmatpush1.msra.mxu0 0.0
  %675 = vmatprep.subr.mxu0 0.0
  %676 = vmatpush1.msra.mxu0 0.0
  %677 = vmatprep.subr.mxu0 0.0
  %678 = vmatpush1.msra.mxu0 0.0
  %679 = vmatprep.subr.mxu0 0.0
  %680 = vmatpush1.msra.mxu0 0.0
  %681 = vmatprep.subr.mxu0 0.0
  %682 = vmatpush1.msra.mxu0 0.0
  %683 = vmatprep.subr.mxu0 0.0
  %684 = vmatpush1.msra.mxu0 0.0
  %685 = vmatprep.subr.mxu0 0.0
  %686 = vmatpush1.msra.mxu0 0.0
  %687 = vmatprep.subr.mxu0 0.0
  %688 = vmatpush1.msra.mxu0 0.0
  %689 = vmatprep.mubr.f32.mxu0 0.0
  %690 = vmatmul.mubr.f32.gmra.mrb[0].mxu0 %v32
  %v691 = vpop.f32.mrb[0].mxu0
  %v692 = vadd.f32 0.0, %v691
  %v693 = vpop.f32.mrb[0].mxu0
  %694 = vmatprep.mubr.f32.mxu0 0.0
  %695 = vmatmul.mubr.f32.gmra.mrb[0].mxu0 %v35
  %v696 = vpop.f32.mrb[0].mxu0
  %v697 = vadd.f32 0.0, %v696
  %v698 = vpop.f32.mrb[0].mxu0
  %699 = vdwg.mxu0
  %v700 = vadd.f32 %v692, %v119
  %v701 = vmax.f32 %v700, 0.0
  %702 = vst.msk [vmem:[#allocation2 + $0x28] sm:$0xff] %vm25, %v701
  %703 = vst.msk [vmem:[#allocation3] sm:$0xff] %vm25, %v697
  %v704 = vld [vmem:[#allocation2 + $0x18] sm:$0xff]
  %v705 = vld [vmem:[#allocation2 + $0x20] sm:$0xff]
  %v706 = vld [vmem:[#allocation2 + $0x28] sm:$0xff]
  %v707 = vld [vmem:[%s208] sm:$0xff]
  %708 = vmatprep.subr.mxu0 0.0
  %709 = vmatpush1.msra.mxu0 %v704
  %710 = vmatprep.subr.mxu0 0.0
  %711 = vmatpush1.msra.mxu0 %v705
  %712 = vmatprep.subr.mxu0 0.0
  %713 = vmatpush1.msra.mxu0 %v706
  %714 = vmatprep.subr.mxu0 0.0
  %715 = vmatpush1.msra.mxu0 0.0
  %716 = vmatprep.subr.mxu0 0.0
  %717 = vmatpush1.msra.mxu0 0.0
  %718 = vmatprep.subr.mxu0 0.0
  %719 = vmatpush1.msra.mxu0 0.0
  %720 = vmatprep.subr.mxu0 0.0
  %721 = vmatpush1.msra.mxu0 0.0
  %722 = vmatprep.subr.mxu0 0.0
  %723 = vmatpush1.msra.mxu0 0.0
  %724 = vmatprep.subr.mxu0 0.0
  %725 = vmatpush1.msra.mxu0 0.0
  %726 = vmatprep.subr.mxu0 0.0
  %727 = vmatpush1.msra.mxu0 0.0
  %728 = vmatprep.subr.mxu0 0.0
  %729 = vmatpush1.msra.mxu0 0.0
  %730 = vmatprep.subr.mxu0 0.0
  %731 = vmatpush1.msra.mxu0 0.0
  %732 = vmatprep.subr.mxu0 0.0
  %733 = vmatpush1.msra.mxu0 0.0
  %734 = vmatprep.subr.mxu0 0.0
  %735 = vmatpush1.msra.mxu0 0.0
  %736 = vmatprep.subr.mxu0 0.0
  %737 = vmatpush1.msra.mxu0 0.0
  %738 = vmatprep.subr.mxu0 0.0
  %739 = vmatpush1.msra.mxu0 0.0
  %740 = vmatprep.subr.mxu0 0.0
  %741 = vmatpush1.msra.mxu0 0.0
  %742 = vmatprep.subr.mxu0 0.0
  %743 = vmatpush1.msra.mxu0 0.0
  %744 = vmatprep.subr.mxu0 0.0
  %745 = vmatpush1.msra.mxu0 0.0
  %746 = vmatprep.subr.mxu0 0.0
  %747 = vmatpush1.msra.mxu0 0.0
  %748 = vmatprep.subr.mxu0 0.0
  %749 = vmatpush1.msra.mxu0 0.0
  %750 = vmatprep.subr.mxu0 0.0
  %751 = vmatpush1.msra.mxu0 0.0
  %752 = vmatprep.subr.mxu0 0.0
  %753 = vmatpush1.msra.mxu0 0.0
  %754 = vmatprep.subr.mxu0 0.0
  %755 = vmatpush1.msra.mxu0 0.0
  %756 = vmatprep.subr.mxu0 0.0
  %757 = vmatpush1.msra.mxu0 0.0
  %758 = vmatprep.subr.mxu0 0.0
  %759 = vmatpush1.msra.mxu0 0.0
  %760 = vmatprep.subr.mxu0 0.0
  %761 = vmatpush1.msra.mxu0 0.0
  %762 = vmatprep.subr.mxu0 0.0
  %763 = vmatpush1.msra.mxu0 0.0
  %764 = vmatprep.subr.mxu0 0.0
  %765 = vmatpush1.msra.mxu0 0.0
  %766 = vmatprep.subr.mxu0 0.0
  %767 = vmatpush1.msra.mxu0 0.0
  %768 = vmatprep.subr.mxu0 0.0
  %769 = vmatpush1.msra.mxu0 0.0
  %770 = vmatprep.subr.mxu0 0.0
  %771 = vmatpush1.msra.mxu0 0.0
  %772 = vmatprep.mubr.f32.mxu0 0.0
  %773 = vmatmul.mubr.f32.gmra.mrb[0].mxu0 %v216
  %v774 = vpop.f32.mrb[0].mxu0
  %v775 = vadd.f32 %v707, %v774
  %v776 = vpop.f32.mrb[0].mxu0
  %777 = vdwg.mxu0
  %v778 = vadd.f32 %v775, %v291
  %v779 = vmax.f32 %v778, 0.0
  %s780 = scalar_lea.vmem %s5, 24
  %781 = vst.msk [vmem:[%s780] sm:$0xff] %vm25, %v779
  %v782 = vld [vmem:[%s0 + $0x28] sm:$0xff]
  %v783 = vld [vmem:[%s0 + $0x30] sm:$0xf]
  %v785 = vsel %vm37, %v783, 0
  %787 = vmatprep.subr.mxu0 0.0
  %788 = vmatpush1.msra.mxu0 %v782
  %789 = vmatprep.subr.mxu0 0.0
  %790 = vmatpush1.msra.mxu0 %v785
  %791 = vmatprep.subr.mxu0 0.0
  %792 = vmatpush1.msra.mxu0 0.0
  %793 = vmatprep.subr.mxu0 0.0
  %794 = vmatpush1.msra.mxu0 0.0
  %795 = vmatprep.subr.mxu0 0.0
  %796 = vmatpush1.msra.mxu0 0.0
  %797 = vmatprep.subr.mxu0 0.0
  %798 = vmatpush1.msra.mxu0 0.0
  %799 = vmatprep.subr.mxu0 0.0
  %800 = vmatpush1.msra.mxu0 0.0
  %801 = vmatprep.subr.mxu0 0.0
  %802 = vmatpush1.msra.mxu0 0.0
  %803 = vmatprep.subr.mxu0 0.0
  %804 = vmatpush1.msra.mxu0 0.0
  %805 = vmatprep.subr.mxu0 0.0
  %806 = vmatpush1.msra.mxu0 0.0
  %807 = vmatprep.subr.mxu0 0.0
  %808 = vmatpush1.msra.mxu0 0.0
  %809 = vmatprep.subr.mxu0 0.0
  %810 = vmatpush1.msra.mxu0 0.0
  %811 = vmatprep.subr.mxu0 0.0
  %812 = vmatpush1.msra.mxu0 0.0
  %813 = vmatprep.subr.mxu0 0.0
  %814 = vmatpush1.msra.mxu0 0.0
  %815 = vmatprep.subr.mxu0 0.0
  %816 = vmatpush1.msra.mxu0 0.0
  %817 = vmatprep.subr.mxu0 0.0
  %818 = vmatpush1.msra.mxu0 0.0
  %819 = vmatprep.subr.mxu0 0.0
  %820 = vmatpush1.msra.mxu0 0.0
  %821 = vmatprep.subr.mxu0 0.0
  %822 = vmatpush1.msra.mxu0 0.0
  %823 = vmatprep.subr.mxu0 0.0
  %824 = vmatpush1.msra.mxu0 0.0
  %825 = vmatprep.subr.mxu0 0.0
  %826 = vmatpush1.msra.mxu0 0.0
  %827 = vmatprep.subr.mxu0 0.0
  %828 = vmatpush1.msra.mxu0 0.0
  %829 = vmatprep.subr.mxu0 0.0
  %830 = vmatpush1.msra.mxu0 0.0
  %831 = vmatprep.subr.mxu0 0.0
  %832 = vmatpush1.msra.mxu0 0.0
  %833 = vmatprep.subr.mxu0 0.0
  %834 = vmatpush1.msra.mxu0 0.0
  %835 = vmatprep.subr.mxu0 0.0
  %836 = vmatpush1.msra.mxu0 0.0
  %837 = vmatprep.subr.mxu0 0.0
  %838 = vmatpush1.msra.mxu0 0.0
  %839 = vmatprep.subr.mxu0 0.0
  %840 = vmatpush1.msra.mxu0 0.0
  %841 = vmatprep.subr.mxu0 0.0
  %842 = vmatpush1.msra.mxu0 0.0
  %843 = vmatprep.subr.mxu0 0.0
  %844 = vmatpush1.msra.mxu0 0.0
  %845 = vmatprep.subr.mxu0 0.0
  %846 = vmatpush1.msra.mxu0 0.0
  %847 = vmatprep.subr.mxu0 0.0
  %848 = vmatpush1.msra.mxu0 0.0
  %849 = vmatprep.subr.mxu0 0.0
  %850 = vmatpush1.msra.mxu0 0.0
  %851 = vmatprep.mubr.f32.mxu0 0.0
  %852 = vmatmul.mubr.f32.gmra.mrb[0].mxu0 %v32
  %v853 = vpop.f32.mrb[0].mxu0
  %v854 = vadd.f32 0.0, %v853
  %v855 = vpop.f32.mrb[0].mxu0
  %856 = vmatprep.mubr.f32.mxu0 0.0
  %857 = vmatmul.mubr.f32.gmra.mrb[0].mxu0 %v35
  %v858 = vpop.f32.mrb[0].mxu0
  %v859 = vadd.f32 0.0, %v858
  %v860 = vpop.f32.mrb[0].mxu0
  %861 = vdwg.mxu0
  %v862 = vadd.f32 %v854, %v119
  %v863 = vmax.f32 %v862, 0.0
  %864 = vst.msk [vmem:[#allocation2 + $0x30] sm:$0xff] %vm25, %v863
  %865 = vst.msk [vmem:[%s208] sm:$0xff] %vm25, %v859
  %v866 = vld [vmem:[#allocation2 + $0x20] sm:$0xff]
  %v867 = vld [vmem:[#allocation2 + $0x28] sm:$0xff]
  %v868 = vld [vmem:[#allocation2 + $0x30] sm:$0xff]
  %v869 = vld [vmem:[#allocation3] sm:$0xff]
  %870 = vmatprep.subr.mxu0 0.0
  %871 = vmatpush1.msra.mxu0 %v866
  %872 = vmatprep.subr.mxu0 0.0
  %873 = vmatpush1.msra.mxu0 %v867
  %874 = vmatprep.subr.mxu0 0.0
  %875 = vmatpush1.msra.mxu0 %v868
  %876 = vmatprep.subr.mxu0 0.0
  %877 = vmatpush1.msra.mxu0 0.0
  %878 = vmatprep.subr.mxu0 0.0
  %879 = vmatpush1.msra.mxu0 0.0
  %880 = vmatprep.subr.mxu0 0.0
  %881 = vmatpush1.msra.mxu0 0.0
  %882 = vmatprep.subr.mxu0 0.0
  %883 = vmatpush1.msra.mxu0 0.0
  %884 = vmatprep.subr.mxu0 0.0
  %885 = vmatpush1.msra.mxu0 0.0
  %886 = vmatprep.subr.mxu0 0.0
  %887 = vmatpush1.msra.mxu0 0.0
  %888 = vmatprep.subr.mxu0 0.0
  %889 = vmatpush1.msra.mxu0 0.0
  %890 = vmatprep.subr.mxu0 0.0
  %891 = vmatpush1.msra.mxu0 0.0
  %892 = vmatprep.subr.mxu0 0.0
  %893 = vmatpush1.msra.mxu0 0.0
  %894 = vmatprep.subr.mxu0 0.0
  %895 = vmatpush1.msra.mxu0 0.0
  %896 = vmatprep.subr.mxu0 0.0
  %897 = vmatpush1.msra.mxu0 0.0
  %898 = vmatprep.subr.mxu0 0.0
  %899 = vmatpush1.msra.mxu0 0.0
  %900 = vmatprep.subr.mxu0 0.0
  %901 = vmatpush1.msra.mxu0 0.0
  %902 = vmatprep.subr.mxu0 0.0
  %903 = vmatpush1.msra.mxu0 0.0
  %904 = vmatprep.subr.mxu0 0.0
  %905 = vmatpush1.msra.mxu0 0.0
  %906 = vmatprep.subr.mxu0 0.0
  %907 = vmatpush1.msra.mxu0 0.0
  %908 = vmatprep.subr.mxu0 0.0
  %909 = vmatpush1.msra.mxu0 0.0
  %910 = vmatprep.subr.mxu0 0.0
  %911 = vmatpush1.msra.mxu0 0.0
  %912 = vmatprep.subr.mxu0 0.0
  %913 = vmatpush1.msra.mxu0 0.0
  %914 = vmatprep.subr.mxu0 0.0
  %915 = vmatpush1.msra.mxu0 0.0
  %916 = vmatprep.subr.mxu0 0.0
  %917 = vmatpush1.msra.mxu0 0.0
  %918 = vmatprep.subr.mxu0 0.0
  %919 = vmatpush1.msra.mxu0 0.0
  %920 = vmatprep.subr.mxu0 0.0
  %921 = vmatpush1.msra.mxu0 0.0
  %922 = vmatprep.subr.mxu0 0.0
  %923 = vmatpush1.msra.mxu0 0.0
  %924 = vmatprep.subr.mxu0 0.0
  %925 = vmatpush1.msra.mxu0 0.0
  %926 = vmatprep.subr.mxu0 0.0
  %927 = vmatpush1.msra.mxu0 0.0
  %928 = vmatprep.subr.mxu0 0.0
  %929 = vmatpush1.msra.mxu0 0.0
  %930 = vmatprep.subr.mxu0 0.0
  %931 = vmatpush1.msra.mxu0 0.0
  %932 = vmatprep.subr.mxu0 0.0
  %933 = vmatpush1.msra.mxu0 0.0
  %934 = vmatprep.mubr.f32.mxu0 0.0
  %935 = vmatmul.mubr.f32.gmra.mrb[0].mxu0 %v216
  %v936 = vpop.f32.mrb[0].mxu0
  %v937 = vadd.f32 %v869, %v936
  %v938 = vpop.f32.mrb[0].mxu0
  %939 = vdwg.mxu0
  %v940 = vadd.f32 %v937, %v291
  %v941 = vmax.f32 %v940, 0.0
  %s942 = scalar_lea.vmem %s5, 32
  %943 = vst.msk [vmem:[%s942] sm:$0xff] %vm25, %v941
  %v944 = vld [vmem:[%s0 + $0x30] sm:$0xff]
  %v945 = vld [vmem:[%s0 + $0x38] sm:$0xf]
  %v947 = vsel %vm37, %v945, 0
  %949 = vmatprep.subr.mxu0 0.0
  %950 = vmatpush1.msra.mxu0 %v944
  %951 = vmatprep.subr.mxu0 0.0
  %952 = vmatpush1.msra.mxu0 %v947
  %953 = vmatprep.subr.mxu0 0.0
  %954 = vmatpush1.msra.mxu0 0.0
  %955 = vmatprep.subr.mxu0 0.0
  %956 = vmatpush1.msra.mxu0 0.0
  %957 = vmatprep.subr.mxu0 0.0
  %958 = vmatpush1.msra.mxu0 0.0
  %959 = vmatprep.subr.mxu0 0.0
  %960 = vmatpush1.msra.mxu0 0.0
  %961 = vmatprep.subr.mxu0 0.0
  %962 = vmatpush1.msra.mxu0 0.0
  %963 = vmatprep.subr.mxu0 0.0
  %964 = vmatpush1.msra.mxu0 0.0
  %965 = vmatprep.subr.mxu0 0.0
  %966 = vmatpush1.msra.mxu0 0.0
  %967 = vmatprep.subr.mxu0 0.0
  %968 = vmatpush1.msra.mxu0 0.0
  %969 = vmatprep.subr.mxu0 0.0
  %970 = vmatpush1.msra.mxu0 0.0
  %971 = vmatprep.subr.mxu0 0.0
  %972 = vmatpush1.msra.mxu0 0.0
  %973 = vmatprep.subr.mxu0 0.0
  %974 = vmatpush1.msra.mxu0 0.0
  %975 = vmatprep.subr.mxu0 0.0
  %976 = vmatpush1.msra.mxu0 0.0
  %977 = vmatprep.subr.mxu0 0.0
  %978 = vmatpush1.msra.mxu0 0.0
  %979 = vmatprep.subr.mxu0 0.0
  %980 = vmatpush1.msra.mxu0 0.0
  %981 = vmatprep.subr.mxu0 0.0
  %982 = vmatpush1.msra.mxu0 0.0
  %983 = vmatprep.subr.mxu0 0.0
  %984 = vmatpush1.msra.mxu0 0.0
  %985 = vmatprep.subr.mxu0 0.0
  %986 = vmatpush1.msra.mxu0 0.0
  %987 = vmatprep.subr.mxu0 0.0
  %988 = vmatpush1.msra.mxu0 0.0
  %989 = vmatprep.subr.mxu0 0.0
  %990 = vmatpush1.msra.mxu0 0.0
  %991 = vmatprep.subr.mxu0 0.0
  %992 = vmatpush1.msra.mxu0 0.0
  %993 = vmatprep.subr.mxu0 0.0
  %994 = vmatpush1.msra.mxu0 0.0
  %995 = vmatprep.subr.mxu0 0.0
  %996 = vmatpush1.msra.mxu0 0.0
  %997 = vmatprep.subr.mxu0 0.0
  %998 = vmatpush1.msra.mxu0 0.0
  %999 = vmatprep.subr.mxu0 0.0
  %1000 = vmatpush1.msra.mxu0 0.0
  %1001 = vmatprep.subr.mxu0 0.0
  %1002 = vmatpush1.msra.mxu0 0.0
  %1003 = vmatprep.subr.mxu0 0.0
  %1004 = vmatpush1.msra.mxu0 0.0
  %1005 = vmatprep.subr.mxu0 0.0
  %1006 = vmatpush1.msra.mxu0 0.0
  %1007 = vmatprep.subr.mxu0 0.0
  %1008 = vmatpush1.msra.mxu0 0.0
  %1009 = vmatprep.subr.mxu0 0.0
  %1010 = vmatpush1.msra.mxu0 0.0
  %1011 = vmatprep.subr.mxu0 0.0
  %1012 = vmatpush1.msra.mxu0 0.0
  %1013 = vmatprep.mubr.f32.mxu0 0.0
  %1014 = vmatmul.mubr.f32.gmra.mrb[0].mxu0 %v32
  %v1015 = vpop.f32.mrb[0].mxu0
  %v1016 = vadd.f32 0.0, %v1015
  %v1017 = vpop.f32.mrb[0].mxu0
  %1018 = vmatprep.mubr.f32.mxu0 0.0
  %1019 = vmatmul.mubr.f32.gmra.mrb[0].mxu0 %v35
  %v1020 = vpop.f32.mrb[0].mxu0
  %v1021 = vadd.f32 0.0, %v1020
  %v1022 = vpop.f32.mrb[0].mxu0
  %1023 = vdwg.mxu0
  %v1024 = vadd.f32 %v1016, %v119
  %v1025 = vmax.f32 %v1024, 0.0
  %1026 = vst.msk [vmem:[#allocation2 + $0x38] sm:$0xff] %vm25, %v1025
  %1027 = vst.msk [vmem:[#allocation3] sm:$0xff] %vm25, %v1021
  %v1028 = vld [vmem:[#allocation2 + $0x28] sm:$0xff]
  %v1029 = vld [vmem:[#allocation2 + $0x30] sm:$0xff]
  %v1030 = vld [vmem:[#allocation2 + $0x38] sm:$0xff]
  %v1031 = vld [vmem:[%s208] sm:$0xff]
  %1032 = vmatprep.subr.mxu0 0.0
  %1033 = vmatpush1.msra.mxu0 %v1028
  %1034 = vmatprep.subr.mxu0 0.0
  %1035 = vmatpush1.msra.mxu0 %v1029
  %1036 = vmatprep.subr.mxu0 0.0
  %1037 = vmatpush1.msra.mxu0 %v1030
  %1038 = vmatprep.subr.mxu0 0.0
  %1039 = vmatpush1.msra.mxu0 0.0
  %1040 = vmatprep.subr.mxu0 0.0
  %1041 = vmatpush1.msra.mxu0 0.0
  %1042 = vmatprep.subr.mxu0 0.0
  %1043 = vmatpush1.msra.mxu0 0.0
  %1044 = vmatprep.subr.mxu0 0.0
  %1045 = vmatpush1.msra.mxu0 0.0
  %1046 = vmatprep.subr.mxu0 0.0
  %1047 = vmatpush1.msra.mxu0 0.0
  %1048 = vmatprep.subr.mxu0 0.0
  %1049 = vmatpush1.msra.mxu0 0.0
  %1050 = vmatprep.subr.mxu0 0.0
  %1051 = vmatpush1.msra.mxu0 0.0
  %1052 = vmatprep.subr.mxu0 0.0
  %1053 = vmatpush1.msra.mxu0 0.0
  %1054 = vmatprep.subr.mxu0 0.0
  %1055 = vmatpush1.msra.mxu0 0.0
  %1056 = vmatprep.subr.mxu0 0.0
  %1057 = vmatpush1.msra.mxu0 0.0
  %1058 = vmatprep.subr.mxu0 0.0
  %1059 = vmatpush1.msra.mxu0 0.0
  %1060 = vmatprep.subr.mxu0 0.0
  %1061 = vmatpush1.msra.mxu0 0.0
  %1062 = vmatprep.subr.mxu0 0.0
  %1063 = vmatpush1.msra.mxu0 0.0
  %1064 = vmatprep.subr.mxu0 0.0
  %1065 = vmatpush1.msra.mxu0 0.0
  %1066 = vmatprep.subr.mxu0 0.0
  %1067 = vmatpush1.msra.mxu0 0.0
  %1068 = vmatprep.subr.mxu0 0.0
  %1069 = vmatpush1.msra.mxu0 0.0
  %1070 = vmatprep.subr.mxu0 0.0
  %1071 = vmatpush1.msra.mxu0 0.0
  %1072 = vmatprep.subr.mxu0 0.0
  %1073 = vmatpush1.msra.mxu0 0.0
  %1074 = vmatprep.subr.mxu0 0.0
  %1075 = vmatpush1.msra.mxu0 0.0
  %1076 = vmatprep.subr.mxu0 0.0
  %1077 = vmatpush1.msra.mxu0 0.0
  %1078 = vmatprep.subr.mxu0 0.0
  %1079 = vmatpush1.msra.mxu0 0.0
  %1080 = vmatprep.subr.mxu0 0.0
  %1081 = vmatpush1.msra.mxu0 0.0
  %1082 = vmatprep.subr.mxu0 0.0
  %1083 = vmatpush1.msra.mxu0 0.0
  %1084 = vmatprep.subr.mxu0 0.0
  %1085 = vmatpush1.msra.mxu0 0.0
  %1086 = vmatprep.subr.mxu0 0.0
  %1087 = vmatpush1.msra.mxu0 0.0
  %1088 = vmatprep.subr.mxu0 0.0
  %1089 = vmatpush1.msra.mxu0 0.0
  %1090 = vmatprep.subr.mxu0 0.0
  %1091 = vmatpush1.msra.mxu0 0.0
  %1092 = vmatprep.subr.mxu0 0.0
  %1093 = vmatpush1.msra.mxu0 0.0
  %1094 = vmatprep.subr.mxu0 0.0
  %1095 = vmatpush1.msra.mxu0 0.0
  %1096 = vmatprep.mubr.f32.mxu0 0.0
  %1097 = vmatmul.mubr.f32.gmra.mrb[0].mxu0 %v216
  %v1098 = vpop.f32.mrb[0].mxu0
  %v1099 = vadd.f32 %v1031, %v1098
  %v1100 = vpop.f32.mrb[0].mxu0
  %1101 = vdwg.mxu0
  %v1102 = vadd.f32 %v1099, %v291
  %v1103 = vmax.f32 %v1102, 0.0
  %s1104 = scalar_lea.vmem %s5, 40
  %1105 = vst.msk [vmem:[%s1104] sm:$0xff] %vm25, %v1103
  %v1106 = vld [vmem:[%s0 + $0x38] sm:$0xff]
  %v1107 = vld [vmem:[%s0 + $0x40] sm:$0xf]
  %v1109 = vsel %vm37, %v1107, 0
  %1111 = vmatprep.subr.mxu0 0.0
  %1112 = vmatpush1.msra.mxu0 %v1106
  %1113 = vmatprep.subr.mxu0 0.0
  %1114 = vmatpush1.msra.mxu0 %v1109
  %1115 = vmatprep.subr.mxu0 0.0
  %1116 = vmatpush1.msra.mxu0 0.0
  %1117 = vmatprep.subr.mxu0 0.0
  %1118 = vmatpush1.msra.mxu0 0.0
  %1119 = vmatprep.subr.mxu0 0.0
  %1120 = vmatpush1.msra.mxu0 0.0
  %1121 = vmatprep.subr.mxu0 0.0
  %1122 = vmatpush1.msra.mxu0 0.0
  %1123 = vmatprep.subr.mxu0 0.0
  %1124 = vmatpush1.msra.mxu0 0.0
  %1125 = vmatprep.subr.mxu0 0.0
  %1126 = vmatpush1.msra.mxu0 0.0
  %1127 = vmatprep.subr.mxu0 0.0
  %1128 = vmatpush1.msra.mxu0 0.0
  %1129 = vmatprep.subr.mxu0 0.0
  %1130 = vmatpush1.msra.mxu0 0.0
  %1131 = vmatprep.subr.mxu0 0.0
  %1132 = vmatpush1.msra.mxu0 0.0
  %1133 = vmatprep.subr.mxu0 0.0
  %1134 = vmatpush1.msra.mxu0 0.0
  %1135 = vmatprep.subr.mxu0 0.0
  %1136 = vmatpush1.msra.mxu0 0.0
  %1137 = vmatprep.subr.mxu0 0.0
  %1138 = vmatpush1.msra.mxu0 0.0
  %1139 = vmatprep.subr.mxu0 0.0
  %1140 = vmatpush1.msra.mxu0 0.0
  %1141 = vmatprep.subr.mxu0 0.0
  %1142 = vmatpush1.msra.mxu0 0.0
  %1143 = vmatprep.subr.mxu0 0.0
  %1144 = vmatpush1.msra.mxu0 0.0
  %1145 = vmatprep.subr.mxu0 0.0
  %1146 = vmatpush1.msra.mxu0 0.0
  %1147 = vmatprep.subr.mxu0 0.0
  %1148 = vmatpush1.msra.mxu0 0.0
  %1149 = vmatprep.subr.mxu0 0.0
  %1150 = vmatpush1.msra.mxu0 0.0
  %1151 = vmatprep.subr.mxu0 0.0
  %1152 = vmatpush1.msra.mxu0 0.0
  %1153 = vmatprep.subr.mxu0 0.0
  %1154 = vmatpush1.msra.mxu0 0.0
  %1155 = vmatprep.subr.mxu0 0.0
  %1156 = vmatpush1.msra.mxu0 0.0
  %1157 = vmatprep.subr.mxu0 0.0
  %1158 = vmatpush1.msra.mxu0 0.0
  %1159 = vmatprep.subr.mxu0 0.0
  %1160 = vmatpush1.msra.mxu0 0.0
  %1161 = vmatprep.subr.mxu0 0.0
  %1162 = vmatpush1.msra.mxu0 0.0
  %1163 = vmatprep.subr.mxu0 0.0
  %1164 = vmatpush1.msra.mxu0 0.0
  %1165 = vmatprep.subr.mxu0 0.0
  %1166 = vmatpush1.msra.mxu0 0.0
  %1167 = vmatprep.subr.mxu0 0.0
  %1168 = vmatpush1.msra.mxu0 0.0
  %1169 = vmatprep.subr.mxu0 0.0
  %1170 = vmatpush1.msra.mxu0 0.0
  %1171 = vmatprep.subr.mxu0 0.0
  %1172 = vmatpush1.msra.mxu0 0.0
  %1173 = vmatprep.subr.mxu0 0.0
  %1174 = vmatpush1.msra.mxu0 0.0
  %1175 = vmatprep.mubr.f32.mxu0 0.0
  %1176 = vmatmul.mubr.f32.gmra.mrb[0].mxu0 %v32
  %v1177 = vpop.f32.mrb[0].mxu0
  %v1178 = vadd.f32 0.0, %v1177
  %v1179 = vpop.f32.mrb[0].mxu0
  %1180 = vmatprep.mubr.f32.mxu0 0.0
  %1181 = vmatmul.mubr.f32.gmra.mrb[0].mxu0 %v35
  %v1182 = vpop.f32.mrb[0].mxu0
  %v1183 = vadd.f32 0.0, %v1182
  %v1184 = vpop.f32.mrb[0].mxu0
  %1185 = vdwg.mxu0
  %v1186 = vadd.f32 %v1178, %v119
  %v1187 = vmax.f32 %v1186, 0.0
  %1188 = vst.msk [vmem:[#allocation2 + $0x40] sm:$0xff] %vm25, %v1187
  %1189 = vst.msk [vmem:[%s208] sm:$0xff] %vm25, %v1183
  %v1190 = vld [vmem:[#allocation2 + $0x30] sm:$0xff]
  %v1191 = vld [vmem:[#allocation2 + $0x38] sm:$0xff]
  %v1192 = vld [vmem:[#allocation2 + $0x40] sm:$0xff]
  %v1193 = vld [vmem:[#allocation3] sm:$0xff]
  %1194 = vmatprep.subr.mxu0 0.0
  %1195 = vmatpush1.msra.mxu0 %v1190
  %1196 = vmatprep.subr.mxu0 0.0
  %1197 = vmatpush1.msra.mxu0 %v1191
  %1198 = vmatprep.subr.mxu0 0.0
  %1199 = vmatpush1.msra.mxu0 %v1192
  %1200 = vmatprep.subr.mxu0 0.0
  %1201 = vmatpush1.msra.mxu0 0.0
  %1202 = vmatprep.subr.mxu0 0.0
  %1203 = vmatpush1.msra.mxu0 0.0
  %1204 = vmatprep.subr.mxu0 0.0
  %1205 = vmatpush1.msra.mxu0 0.0
  %1206 = vmatprep.subr.mxu0 0.0
  %1207 = vmatpush1.msra.mxu0 0.0
  %1208 = vmatprep.subr.mxu0 0.0
  %1209 = vmatpush1.msra.mxu0 0.0
  %1210 = vmatprep.subr.mxu0 0.0
  %1211 = vmatpush1.msra.mxu0 0.0
  %1212 = vmatprep.subr.mxu0 0.0
  %1213 = vmatpush1.msra.mxu0 0.0
  %1214 = vmatprep.subr.mxu0 0.0
  %1215 = vmatpush1.msra.mxu0 0.0
  %1216 = vmatprep.subr.mxu0 0.0
  %1217 = vmatpush1.msra.mxu0 0.0
  %1218 = vmatprep.subr.mxu0 0.0
  %1219 = vmatpush1.msra.mxu0 0.0
  %1220 = vmatprep.subr.mxu0 0.0
  %1221 = vmatpush1.msra.mxu0 0.0
  %1222 = vmatprep.subr.mxu0 0.0
  %1223 = vmatpush1.msra.mxu0 0.0
  %1224 = vmatprep.subr.mxu0 0.0
  %1225 = vmatpush1.msra.mxu0 0.0
  %1226 = vmatprep.subr.mxu0 0.0
  %1227 = vmatpush1.msra.mxu0 0.0
  %1228 = vmatprep.subr.mxu0 0.0
  %1229 = vmatpush1.msra.mxu0 0.0
  %1230 = vmatprep.subr.mxu0 0.0
  %1231 = vmatpush1.msra.mxu0 0.0
  %1232 = vmatprep.subr.mxu0 0.0
  %1233 = vmatpush1.msra.mxu0 0.0
  %1234 = vmatprep.subr.mxu0 0.0
  %1235 = vmatpush1.msra.mxu0 0.0
  %1236 = vmatprep.subr.mxu0 0.0
  %1237 = vmatpush1.msra.mxu0 0.0
  %1238 = vmatprep.subr.mxu0 0.0
  %1239 = vmatpush1.msra.mxu0 0.0
  %1240 = vmatprep.subr.mxu0 0.0
  %1241 = vmatpush1.msra.mxu0 0.0
  %1242 = vmatprep.subr.mxu0 0.0
  %1243 = vmatpush1.msra.mxu0 0.0
  %1244 = vmatprep.subr.mxu0 0.0
  %1245 = vmatpush1.msra.mxu0 0.0
  %1246 = vmatprep.subr.mxu0 0.0
  %1247 = vmatpush1.msra.mxu0 0.0
  %1248 = vmatprep.subr.mxu0 0.0
  %1249 = vmatpush1.msra.mxu0 0.0
  %1250 = vmatprep.subr.mxu0 0.0
  %1251 = vmatpush1.msra.mxu0 0.0
  %1252 = vmatprep.subr.mxu0 0.0
  %1253 = vmatpush1.msra.mxu0 0.0
  %1254 = vmatprep.subr.mxu0 0.0
  %1255 = vmatpush1.msra.mxu0 0.0
  %1256 = vmatprep.subr.mxu0 0.0
  %1257 = vmatpush1.msra.mxu0 0.0
  %1258 = vmatprep.mubr.f32.mxu0 0.0
  %1259 = vmatmul.mubr.f32.gmra.mrb[0].mxu0 %v216
  %v1260 = vpop.f32.mrb[0].mxu0
  %v1261 = vadd.f32 %v1193, %v1260
  %v1262 = vpop.f32.mrb[0].mxu0
  %1263 = vdwg.mxu0
  %v1264 = vadd.f32 %v1261, %v291
  %v1265 = vmax.f32 %v1264, 0.0
  %s1266 = scalar_lea.vmem %s5, 48
  %1267 = vst.msk [vmem:[%s1266] sm:$0xff] %vm25, %v1265
  %v1268 = vld [vmem:[#allocation2 + $0x38] sm:$0xff]
  %v1269 = vld [vmem:[#allocation2 + $0x40] sm:$0xff]
  %v1270 = vld [vmem:[#allocation2 + $0x48] sm:$0xff]
  %v1271 = vld [vmem:[%s208] sm:$0xff]
  %1272 = vmatprep.subr.mxu0 0.0
  %1273 = vmatpush1.msra.mxu0 %v1268
  %1274 = vmatprep.subr.mxu0 0.0
  %1275 = vmatpush1.msra.mxu0 %v1269
  %1276 = vmatprep.subr.mxu0 0.0
  %1277 = vmatpush1.msra.mxu0 %v1270
  %1278 = vmatprep.subr.mxu0 0.0
  %1279 = vmatpush1.msra.mxu0 0.0
  %1280 = vmatprep.subr.mxu0 0.0
  %1281 = vmatpush1.msra.mxu0 0.0
  %1282 = vmatprep.subr.mxu0 0.0
  %1283 = vmatpush1.msra.mxu0 0.0
  %1284 = vmatprep.subr.mxu0 0.0
  %1285 = vmatpush1.msra.mxu0 0.0
  %1286 = vmatprep.subr.mxu0 0.0
  %1287 = vmatpush1.msra.mxu0 0.0
  %1288 = vmatprep.subr.mxu0 0.0
  %1289 = vmatpush1.msra.mxu0 0.0
  %1290 = vmatprep.subr.mxu0 0.0
  %1291 = vmatpush1.msra.mxu0 0.0
  %1292 = vmatprep.subr.mxu0 0.0
  %1293 = vmatpush1.msra.mxu0 0.0
  %1294 = vmatprep.subr.mxu0 0.0
  %1295 = vmatpush1.msra.mxu0 0.0
  %1296 = vmatprep.subr.mxu0 0.0
  %1297 = vmatpush1.msra.mxu0 0.0
  %1298 = vmatprep.subr.mxu0 0.0
  %1299 = vmatpush1.msra.mxu0 0.0
  %1300 = vmatprep.subr.mxu0 0.0
  %1301 = vmatpush1.msra.mxu0 0.0
  %1302 = vmatprep.subr.mxu0 0.0
  %1303 = vmatpush1.msra.mxu0 0.0
  %1304 = vmatprep.subr.mxu0 0.0
  %1305 = vmatpush1.msra.mxu0 0.0
  %1306 = vmatprep.subr.mxu0 0.0
  %1307 = vmatpush1.msra.mxu0 0.0
  %1308 = vmatprep.subr.mxu0 0.0
  %1309 = vmatpush1.msra.mxu0 0.0
  %1310 = vmatprep.subr.mxu0 0.0
  %1311 = vmatpush1.msra.mxu0 0.0
  %1312 = vmatprep.subr.mxu0 0.0
  %1313 = vmatpush1.msra.mxu0 0.0
  %1314 = vmatprep.subr.mxu0 0.0
  %1315 = vmatpush1.msra.mxu0 0.0
  %1316 = vmatprep.subr.mxu0 0.0
  %1317 = vmatpush1.msra.mxu0 0.0
  %1318 = vmatprep.subr.mxu0 0.0
  %1319 = vmatpush1.msra.mxu0 0.0
  %1320 = vmatprep.subr.mxu0 0.0
  %1321 = vmatpush1.msra.mxu0 0.0
  %1322 = vmatprep.subr.mxu0 0.0
  %1323 = vmatpush1.msra.mxu0 0.0
  %1324 = vmatprep.subr.mxu0 0.0
  %1325 = vmatpush1.msra.mxu0 0.0
  %1326 = vmatprep.subr.mxu0 0.0
  %1327 = vmatpush1.msra.mxu0 0.0
  %1328 = vmatprep.subr.mxu0 0.0
  %1329 = vmatpush1.msra.mxu0 0.0
  %1330 = vmatprep.subr.mxu0 0.0
  %1331 = vmatpush1.msra.mxu0 0.0
  %1332 = vmatprep.subr.mxu0 0.0
  %1333 = vmatpush1.msra.mxu0 0.0
  %1334 = vmatprep.subr.mxu0 0.0
  %1335 = vmatpush1.msra.mxu0 0.0
  %1336 = vmatprep.mubr.f32.mxu0 0.0
  %1337 = vmatmul.mubr.f32.gmra.mrb[0].mxu0 %v216
  %v1338 = vpop.f32.mrb[0].mxu0
  %v1339 = vadd.f32 %v1271, %v1338
  %v1340 = vpop.f32.mrb[0].mxu0
  %1341 = vdwg.mxu0
  %v1342 = vadd.f32 %v1339, %v291
  %v1343 = vmax.f32 %v1342, 0.0
  %s1344 = scalar_lea.vmem %s5, 56
  %1345 = vst.msk [vmem:[%s1344] sm:$0xff] %vm25, %v1343
  // Predicated region
  $region22: #{res_block_conv_shortcut.1} parent=0 // pred_check
    _
  $region23: #{res_block_conv_shortcut.1} parent=0 // pred_check_branch
    %1347 = sbr.rel (0) target = $region25
  $region24: #{res_block_conv_shortcut.1} parent=0 // pred_region
    _
  $region25: #{res_block_conv_shortcut.1} parent=0 // pred_fallthru
    _
  // Predicated region
  $region26: #{res_block_conv_shortcut.1} parent=0 // pred_check
    _
  $region27: #{res_block_conv_shortcut.1} parent=0 // pred_check_branch
    %1349 = sbr.rel (0) target = $region29
  $region28: #{res_block_conv_shortcut.1} parent=0 // pred_region
    _
  $region29: #{res_block_conv_shortcut.1} parent=0 // pred_fallthru
    _

</llo_original>
